<compile_context>
chip_gen: v7x
topology: tpu7x:2x2x1
jax: 0.10.0
libtpu: 0.0.40
codegen_flags: <defaults>
</compile_context>

<pallas_src>
import jax
import jax.numpy as jnp
from jax.experimental import pallas as pl
from jax.experimental.pallas import tpu as pltpu

# ------------------------- model hyper-parameters -------------------------
DIM = 32          # embedding dim (LayerNorm dim)
HEADS = 2
DIM_HEAD = 16
INNER = HEADS * DIM_HEAD
SCALE = DIM_HEAD ** -0.5
LN_EPS = 1e-5     # PyTorch nn.LayerNorm default

assert INNER == DIM  # lets gamma/beta/bo and the head masks share one const slab


# ------------------------------- kernel ------------------------------------
def _prenorm_attn_kernel(q_ref, kv_ref, consts_ref, bias_ref,
                         wq_ref, wkv_ref, wo_ref, o_ref):
    rq = q_ref.shape[0]                 # bb * Nq_pad
    rk = kv_ref.shape[0] // 2           # bb * Nk_pad

    q = q_ref[...].astype(jnp.float32)          # kept for the residual
    kv = kv_ref[...].astype(jnp.float32)        # rows [0,rk) = k, [rk,2rk) = v

    gamma = consts_ref[0:1, :]
    beta = consts_ref[1:2, :]
    bo = consts_ref[2:3, :]

    def ln(x):   # nn.LayerNorm: biased variance, eps inside rsqrt
        mean = jnp.mean(x, axis=-1, keepdims=True)
        var = jnp.mean(jnp.square(x - mean), axis=-1, keepdims=True)
        return (x - mean) * jax.lax.rsqrt(var + LN_EPS) * gamma + beta

    qn = ln(q)                      # [rq, D]
    kvn = ln(kv)                    # [2*rk, D]  (no in-kernel slab concat)

    # ---- split QKV projection: only the needed MACs ----
    qh = jnp.dot(qn, wq_ref[...], preferred_element_type=jnp.float32)      # [rq, INNER]
    kvp = jnp.dot(kvn, wkv_ref[...], preferred_element_type=jnp.float32)   # [2rk, 2*INNER]
    kh = kvp[0:rk, 0:INNER]                    # LN(k) @ Wk
    vh = kvp[rk:2 * rk, INNER:2 * INNER]       # LN(v) @ Wv

    # ---- heads stacked along rows; q head-column-masked, k/v unreplicated ----
    qs = jnp.concatenate(
        [qh * consts_ref[3 + h:4 + h, :] for h in range(HEADS)], axis=0)   # [H*rq, INNER]

    dots = jax.lax.dot_general(
        qs, kh, (((1,), (1,)), ((), ())),
        preferred_element_type=jnp.float32) * SCALE                        # [H*rq, rk]
    # (head, batch)-block validity + key-padding mask as one additive bias
    dots = dots + bias_ref[...]

    dots = dots - jnp.max(dots, axis=-1, keepdims=True)
    ex = jnp.exp(dots)
    attn = ex * pl.reciprocal(jnp.sum(ex, axis=-1, keepdims=True), approx=True)

    ctx_full = jnp.dot(attn, vh, preferred_element_type=jnp.float32)       # [H*rq, INNER]
    # recover per-head outputs: each head's row block, masked to its own columns
    ctx = ctx_full[0:rq, :] * consts_ref[3:4, :]
    for h in range(1, HEADS):
        ctx = ctx + ctx_full[h * rq:(h + 1) * rq, :] * consts_ref[3 + h:4 + h, :]

    # output projection + residual (residual is the *un-normalized* q)
    y = jnp.dot(ctx, wo_ref[...], preferred_element_type=jnp.float32) + bo
    o_ref[...] = (y + q).astype(o_ref.dtype)


# ------------------------------ wrapper -------------------------------------
def _round_up(x, m):
    return (x + m - 1) // m * m


def _vmem_capacity_bytes():
    try:
        info = pltpu.get_tpu_info()
        cap = getattr(info, "vmem_capacity_bytes", None)
        if cap:
            return int(cap)
    except Exception:
        pass
    return 64 * 1024 * 1024    # v7x per-core VMEM — smallest of v5e/v6e/v7x


def _estimate_vmem_bytes(bb, nq, nk):
    """Rough per-step VMEM footprint (f32): double-buffered tiles + live temps."""
    f = 4
    rq, rk = bb * nq, bb * nk
    tiles = 2 * f * (rq * DIM + 2 * rk * DIM + rq * DIM)       # q, kv, out (x2 buffers)
    bias = 2 * f * HEADS * rq * rk
    inter = f * (3 * HEADS * rq * rk                           # dots / ex / attn
                 + 2 * HEADS * rq * INNER                      # qs, ctx_full
                 + rq * (DIM + INNER) + 2 * rk * (DIM + 2 * INNER))
    weights = 2 * f * (DIM * INNER + DIM * 2 * INNER + INNER * DIM + (3 + HEADS) * DIM)
    return tiles + bias + inter + weights


def _pick_block_batch(batch, nq, nk, vmem_budget):
    """Batch items per grid step.

    QK^T / softmax work and the dots footprint grow ~bb^2 while useful work grows
    ~bb, so bb is capped at 4.  We also require >=2 grid steps whenever batch >= 2
    (keeps both v7x TensorCores busy and lets the DMA pipeline overlap), keep row
    tiles bounded, and keep the estimated VMEM under the per-generation budget.
    """
    best = 1
    for bb in range(1, min(batch, 4) + 1):
        if batch % bb:
            continue
        if batch > 1 and batch // bb < 2:
            continue
        if bb * max(nq, 2 * nk) > 1024:
            continue
        if _estimate_vmem_bytes(bb, nq, nk) > vmem_budget:
            continue
        best = bb
    return best


def prenorm_attention_qkv(q, k, v, params):
    """q: [B, Nq, D], k/v: [B, Nk, D]. Returns [B, Nq, D]."""
    B, Nq, D = q.shape
    _, Nk, _ = k.shape
    assert D == DIM and k.shape == v.shape and k.shape[0] == B

    # Pad sequence lengths to a sublane multiple so row tiles are always
    # 8-aligned -> >=2 "parallel" grid steps whenever B >= 2, even for odd Nq/Nk.
    # Padded key rows are masked by the additive bias; padded q rows are dropped.
    Nq_p = _round_up(Nq, 8)
    Nk_p = _round_up(Nk, 8)
    if Nq_p != Nq:
        q = jnp.pad(q, ((0, 0), (0, Nq_p - Nq), (0, 0)))
    if Nk_p != Nk:
        k = jnp.pad(k, ((0, 0), (0, Nk_p - Nk), (0, 0)))
        v = jnp.pad(v, ((0, 0), (0, Nk_p - Nk), (0, 0)))

    vmem_budget = (_vmem_capacity_bytes() * 3) // 4        # 25% headroom
    bb = _pick_block_batch(B, Nq_p, Nk_p, vmem_budget)
    G = B // bb
    rq, rk = bb * Nq_p, bb * Nk_p

    # Row slabs (free XLA reshapes).  k and v are pre-stacked *per grid step* so
    # the kernel never concatenates slabs in VMEM: rows [0,rk)=k, [rk,2rk)=v.
    q2 = q.reshape(B * Nq_p, D)
    kv2 = jnp.concatenate(
        [k.reshape(G, rk, D), v.reshape(G, rk, D)], axis=1).reshape(G * 2 * rk, D)

    # Small constants consolidated into one slab: gamma, beta, bo, head masks.
    col = jnp.arange(INNER)
    hmasks = jnp.stack(
        [((col >= h * DIM_HEAD) & (col < (h + 1) * DIM_HEAD)).astype(jnp.float32)
         for h in range(HEADS)], axis=0)                    # [HEADS, INNER]
    consts = jnp.concatenate(
        [params["gamma"].reshape(1, D), params["beta"].reshape(1, D),
         params["bo"].reshape(1, D), hmasks], axis=0).astype(jnp.float32)

    # (head, batch)-block validity (+ key-padding) as an additive 0/-1e30 bias.
    # Identical for every grid step -> constant index_map, DMA'd once.
    row_b = (jnp.arange(HEADS * rq) % rq) // Nq_p           # batch item of each q row
    col_b = jnp.arange(rk) // Nk_p                          # batch item of each key col
    col_j = jnp.arange(rk) % Nk_p                           # key index within batch item
    valid = (row_b[:, None] == col_b[None, :]) & (col_j[None, :] < Nk)
    bias = jnp.where(valid, 0.0, -1e30).astype(jnp.float32)   # [HEADS*rq, rk]

    wkv = jnp.concatenate([params["wk"], params["wv"]], axis=1)   # [D, 2*INNER]

    def const_spec(shape):
        return pl.BlockSpec(shape, lambda i: (0,) * len(shape))

    out2 = pl.pallas_call(
        _prenorm_attn_kernel,
        out_shape=jax.ShapeDtypeStruct((B * Nq_p, D), q.dtype),
        grid=(G,),
        in_specs=[
            pl.BlockSpec((rq, D), lambda i: (i, 0)),        # q rows
            pl.BlockSpec((2 * rk, D), lambda i: (i, 0)),    # [k ; v] rows
            const_spec((3 + HEADS, D)),                     # gamma/beta/bo/head masks
            const_spec((HEADS * rq, rk)),                   # additive validity bias
            const_spec((D, INNER)),                         # Wq
            const_spec((D, 2 * INNER)),                     # [Wk | Wv]
            const_spec((INNER, D)),                         # Wo
        ],
        out_specs=pl.BlockSpec((rq, D), lambda i: (i, 0)),
        compiler_params=pltpu.CompilerParams(
            dimension_semantics=("parallel",),
            vmem_limit_bytes=int(vmem_budget)),
    )(q2, kv2, consts, bias, params["wq"], wkv, params["wo"])

    return out2.reshape(B, Nq_p, D)[:, :Nq, :]


# ------------------------- pure-JAX reference ------------------------------
def _reference(q, k, v, p):
    def ln(x):
        m = jnp.mean(x, axis=-1, keepdims=True)
        var = jnp.mean(jnp.square(x - m), axis=-1, keepdims=True)
        return (x - m) / jnp.sqrt(var + LN_EPS) * p["gamma"] + p["beta"]

    qn, kn, vn = ln(q), ln(k), ln(v)
    qh = qn @ p["wq"]
    kh = kn @ p["wk"]
    vh = vn @ p["wv"]
    B, Nq, _ = q.shape
    Nk = k.shape[1]
    qh = qh.reshape(B, Nq, HEADS, DIM_HEAD).transpose(0, 2, 1, 3)
    kh = kh.reshape(B, Nk, HEADS, DIM_HEAD).transpose(0, 2, 1, 3)
    vh = vh.reshape(B, Nk, HEADS, DIM_HEAD).transpose(0, 2, 1, 3)
    dots = jnp.einsum("bhid,bhjd->bhij", qh, kh) * SCALE
    attn = jax.nn.softmax(dots, axis=-1)
    out = jnp.einsum("bhij,bhjd->bhid", attn, vh)
    out = out.transpose(0, 2, 1, 3).reshape(B, Nq, INNER)
    return out @ p["wo"] + p["bo"] + q


if __name__ == "__main__":
    # B=4 exercises the multi-step (bb=2, grid=2) path; Nq=Nk=12 exercises the
    # sublane padding (12 -> 16) and the bias masking of padded key rows.
    B, Nq, Nk = 4, 12, 12

    key = jax.random.PRNGKey(0)
    ks = jax.random.split(key, 8)

    q = jax.random.normal(ks[0], (B, Nq, DIM), dtype=jnp.float32)
    k = jax.random.normal(ks[1], (B, Nk, DIM), dtype=jnp.float32)
    v = jax.random.normal(ks[2], (B, Nk, DIM), dtype=jnp.float32)

    params = {
        "gamma": jnp.ones((DIM,), jnp.float32),
        "beta": jnp.zeros((DIM,), jnp.float32),
        "wq": 0.1 * jax.random.normal(ks[3], (DIM, INNER), dtype=jnp.float32),
        "wk": 0.1 * jax.random.normal(ks[4], (DIM, INNER), dtype=jnp.float32),
        "wv": 0.1 * jax.random.normal(ks[5], (DIM, INNER), dtype=jnp.float32),
        "wo": 0.1 * jax.random.normal(ks[6], (INNER, DIM), dtype=jnp.float32),
        "bo": 0.01 * jax.random.normal(ks[7], (DIM,), dtype=jnp.float32),
    }

    out = prenorm_attention_qkv(q, k, v, params)
    out = jax.block_until_ready(out)

    ref = _reference(q, k, v, params)
    assert out.shape == (B, Nq, DIM)
    # approx reciprocal (EUP vrcp) in the softmax can deviate up to ~1e-3
    # relative from the exact-division reference; everything else is exact f32.
    assert jnp.allclose(out, ref, atol=1e-3, rtol=1e-3), "mismatch vs reference"

    print("KERNEL_OK")
</pallas_src>

<mosaic_0001>
module attributes {stable_mosaic.version = 11 : i64} {
  func.func @_prenorm_attn_kernel(%arg0: i32, %arg1: memref<32x32xf32, #tpu.memory_space<vmem>>, %arg2: memref<64x32xf32, #tpu.memory_space<vmem>>, %arg3: memref<5x32xf32, #tpu.memory_space<vmem>>, %arg4: memref<64x32xf32, #tpu.memory_space<vmem>>, %arg5: memref<32x32xf32, #tpu.memory_space<vmem>>, %arg6: memref<32x64xf32, #tpu.memory_space<vmem>>, %arg7: memref<32x32xf32, #tpu.memory_space<vmem>>, %arg8: memref<32x32xf32, #tpu.memory_space<vmem>>) attributes {dimension_semantics = [#tpu.dimension_semantics<parallel>], iteration_bounds = array<i64: 2>, scalar_prefetch = 0 : i64, scratch_operands = 0 : i64, tpu.core_type = #tpu.core_type<tc>, window_params = [{transform_indices = @transform_0, window_bounds = array<i64: 32, 32>}, {transform_indices = @transform_1, window_bounds = array<i64: 64, 32>}, {pipeline_mode = #tpu.pipeline_mode<synchronous>, transform_indices = @transform_2, window_bounds = array<i64: 5, 32>}, {pipeline_mode = #tpu.pipeline_mode<synchronous>, transform_indices = @transform_3, window_bounds = array<i64: 64, 32>}, {pipeline_mode = #tpu.pipeline_mode<synchronous>, transform_indices = @transform_4, window_bounds = array<i64: 32, 32>}, {pipeline_mode = #tpu.pipeline_mode<synchronous>, transform_indices = @transform_5, window_bounds = array<i64: 32, 64>}, {pipeline_mode = #tpu.pipeline_mode<synchronous>, transform_indices = @transform_6, window_bounds = array<i64: 32, 32>}, {transform_indices = @transform_7, window_bounds = array<i64: 32, 32>}]} {
    %c0 = arith.constant 0 : index
    %c0_0 = arith.constant 0 : index
    %0 = vector.load %arg1[%c0, %c0_0] : memref<32x32xf32, #tpu.memory_space<vmem>>, vector<32x32xf32>
    %c0_1 = arith.constant 0 : index
    %c0_2 = arith.constant 0 : index
    %1 = vector.load %arg2[%c0_1, %c0_2] : memref<64x32xf32, #tpu.memory_space<vmem>>, vector<64x32xf32>
    %c0_3 = arith.constant 0 : index
    %c0_4 = arith.constant 0 : index
    %2 = vector.load %arg3[%c0_3, %c0_4] : memref<5x32xf32, #tpu.memory_space<vmem>>, vector<1x32xf32>
    %c1 = arith.constant 1 : index
    %c0_5 = arith.constant 0 : index
    %3 = vector.load %arg3[%c1, %c0_5] : memref<5x32xf32, #tpu.memory_space<vmem>>, vector<1x32xf32>
    %c2 = arith.constant 2 : index
    %c0_6 = arith.constant 0 : index
    %4 = vector.load %arg3[%c2, %c0_6] : memref<5x32xf32, #tpu.memory_space<vmem>>, vector<1x32xf32>
    %cst = arith.constant dense<0.000000e+00> : vector<32xf32>
    %5 = vector.multi_reduction <add>, %0, %cst [1] : vector<32x32xf32> to vector<32xf32>
    %6 = vector.shape_cast %5 : vector<32xf32> to vector<32x1xf32>
    %cst_7 = arith.constant 3.200000e+01 : f32
    %7 = vector.broadcast %cst_7 : f32 to vector<32x1xf32>
    %8 = arith.divf %6, %7 : vector<32x1xf32>
    %9 = vector.broadcast %8 : vector<32x1xf32> to vector<32x32xf32>
    %10 = arith.subf %0, %9 : vector<32x32xf32>
    %11 = arith.mulf %10, %10 : vector<32x32xf32>
    %cst_8 = arith.constant dense<0.000000e+00> : vector<32xf32>
    %12 = vector.multi_reduction <add>, %11, %cst_8 [1] : vector<32x32xf32> to vector<32xf32>
    %13 = vector.shape_cast %12 : vector<32xf32> to vector<32x1xf32>
    %cst_9 = arith.constant 3.200000e+01 : f32
    %14 = vector.broadcast %cst_9 : f32 to vector<32x1xf32>
    %15 = arith.divf %13, %14 : vector<32x1xf32>
    %16 = vector.broadcast %8 : vector<32x1xf32> to vector<32x32xf32>
    %17 = arith.subf %0, %16 : vector<32x32xf32>
    %cst_10 = arith.constant 9.99999974E-6 : f32
    %18 = vector.broadcast %cst_10 : f32 to vector<32x1xf32>
    %19 = arith.addf %15, %18 : vector<32x1xf32>
    %20 = math.rsqrt %19 : vector<32x1xf32>
    %21 = vector.broadcast %20 : vector<32x1xf32> to vector<32x32xf32>
    %22 = arith.mulf %17, %21 : vector<32x32xf32>
    %23 = vector.broadcast %2 : vector<1x32xf32> to vector<32x32xf32>
    %24 = arith.mulf %22, %23 : vector<32x32xf32>
    %25 = vector.broadcast %3 : vector<1x32xf32> to vector<32x32xf32>
    %26 = arith.addf %24, %25 : vector<32x32xf32>
    %cst_11 = arith.constant dense<0.000000e+00> : vector<64xf32>
    %27 = vector.multi_reduction <add>, %1, %cst_11 [1] : vector<64x32xf32> to vector<64xf32>
    %28 = vector.shape_cast %27 : vector<64xf32> to vector<64x1xf32>
    %cst_12 = arith.constant 3.200000e+01 : f32
    %29 = vector.broadcast %cst_12 : f32 to vector<64x1xf32>
    %30 = arith.divf %28, %29 : vector<64x1xf32>
    %31 = vector.broadcast %30 : vector<64x1xf32> to vector<64x32xf32>
    %32 = arith.subf %1, %31 : vector<64x32xf32>
    %33 = arith.mulf %32, %32 : vector<64x32xf32>
    %cst_13 = arith.constant dense<0.000000e+00> : vector<64xf32>
    %34 = vector.multi_reduction <add>, %33, %cst_13 [1] : vector<64x32xf32> to vector<64xf32>
    %35 = vector.shape_cast %34 : vector<64xf32> to vector<64x1xf32>
    %cst_14 = arith.constant 3.200000e+01 : f32
    %36 = vector.broadcast %cst_14 : f32 to vector<64x1xf32>
    %37 = arith.divf %35, %36 : vector<64x1xf32>
    %38 = vector.broadcast %30 : vector<64x1xf32> to vector<64x32xf32>
    %39 = arith.subf %1, %38 : vector<64x32xf32>
    %cst_15 = arith.constant 9.99999974E-6 : f32
    %40 = vector.broadcast %cst_15 : f32 to vector<64x1xf32>
    %41 = arith.addf %37, %40 : vector<64x1xf32>
    %42 = math.rsqrt %41 : vector<64x1xf32>
    %43 = vector.broadcast %42 : vector<64x1xf32> to vector<64x32xf32>
    %44 = arith.mulf %39, %43 : vector<64x32xf32>
    %45 = vector.broadcast %2 : vector<1x32xf32> to vector<64x32xf32>
    %46 = arith.mulf %44, %45 : vector<64x32xf32>
    %47 = vector.broadcast %3 : vector<1x32xf32> to vector<64x32xf32>
    %48 = arith.addf %46, %47 : vector<64x32xf32>
    %c0_16 = arith.constant 0 : index
    %c0_17 = arith.constant 0 : index
    %49 = vector.load %arg5[%c0_16, %c0_17] : memref<32x32xf32, #tpu.memory_space<vmem>>, vector<32x32xf32>
    %cst_18 = arith.constant dense<0.000000e+00> : vector<32x32xf32>
    %50 = tpu.matmul %26, %49, %cst_18 {dimension_numbers = #tpu.dot_dimension_numbers<[1], [0], [0], [1], [0, 0, 1, 1], [], []>} : vector<32x32xf32>, vector<32x32xf32>, vector<32x32xf32> -> vector<32x32xf32>
    %c0_19 = arith.constant 0 : index
    %c0_20 = arith.constant 0 : index
    %51 = vector.load %arg6[%c0_19, %c0_20] : memref<32x64xf32, #tpu.memory_space<vmem>>, vector<32x64xf32>
    %cst_21 = arith.constant dense<0.000000e+00> : vector<64x64xf32>
    %52 = tpu.matmul %48, %51, %cst_21 {dimension_numbers = #tpu.dot_dimension_numbers<[1], [0], [0], [1], [0, 0, 1, 1], [], []>} : vector<64x32xf32>, vector<32x64xf32>, vector<64x64xf32> -> vector<64x64xf32>
    %53 = vector.extract_strided_slice %52 {offsets = [0, 0], sizes = [32, 32], strides = [1, 1]} : vector<64x64xf32> to vector<32x32xf32>
    %54 = vector.extract_strided_slice %52 {offsets = [32, 32], sizes = [32, 32], strides = [1, 1]} : vector<64x64xf32> to vector<32x32xf32>
    %c3 = arith.constant 3 : index
    %c0_22 = arith.constant 0 : index
    %55 = vector.load %arg3[%c3, %c0_22] : memref<5x32xf32, #tpu.memory_space<vmem>>, vector<1x32xf32>
    %56 = vector.broadcast %55 : vector<1x32xf32> to vector<32x32xf32>
    %57 = arith.mulf %50, %56 : vector<32x32xf32>
    %c4 = arith.constant 4 : index
    %c0_23 = arith.constant 0 : index
    %58 = vector.load %arg3[%c4, %c0_23] : memref<5x32xf32, #tpu.memory_space<vmem>>, vector<1x32xf32>
    %59 = vector.broadcast %58 : vector<1x32xf32> to vector<32x32xf32>
    %60 = arith.mulf %50, %59 : vector<32x32xf32>
    %61 = tpu.concatenate %57, %60 in 0 : vector<32x32xf32>, vector<32x32xf32> -> vector<64x32xf32>
    %cst_24 = arith.constant dense<0.000000e+00> : vector<64x32xf32>
    %62 = tpu.matmul %61, %53, %cst_24 {dimension_numbers = #tpu.dot_dimension_numbers<[1], [1], [0], [0], [0, 0, 1, 0], [], []>} : vector<64x32xf32>, vector<32x32xf32>, vector<64x32xf32> -> vector<64x32xf32>
    %cst_25 = arith.constant 2.500000e-01 : f32
    %63 = vector.broadcast %cst_25 : f32 to vector<64x32xf32>
    %64 = arith.mulf %62, %63 : vector<64x32xf32>
    %c0_26 = arith.constant 0 : index
    %c0_27 = arith.constant 0 : index
    %65 = vector.load %arg4[%c0_26, %c0_27] : memref<64x32xf32, #tpu.memory_space<vmem>>, vector<64x32xf32>
    %66 = arith.addf %64, %65 : vector<64x32xf32>
    %cst_28 = arith.constant dense<0xFF800000> : vector<64xf32>
    %67 = vector.multi_reduction <maximumf>, %66, %cst_28 [1] : vector<64x32xf32> to vector<64xf32>
    %68 = vector.shape_cast %67 : vector<64xf32> to vector<64x1xf32>
    %69 = vector.broadcast %68 : vector<64x1xf32> to vector<64x32xf32>
    %70 = arith.subf %66, %69 : vector<64x32xf32>
    %71 = math.exp %70 : vector<64x32xf32>
    %cst_29 = arith.constant dense<0.000000e+00> : vector<64xf32>
    %72 = vector.multi_reduction <add>, %71, %cst_29 [1] : vector<64x32xf32> to vector<64xf32>
    %73 = vector.shape_cast %72 : vector<64xf32> to vector<64x1xf32>
    %74 = tpu.reciprocal %73 {approx = true} : vector<64x1xf32> -> vector<64x1xf32>
    %75 = vector.broadcast %74 : vector<64x1xf32> to vector<64x32xf32>
    %76 = arith.mulf %71, %75 : vector<64x32xf32>
    %cst_30 = arith.constant dense<0.000000e+00> : vector<64x32xf32>
    %77 = tpu.matmul %76, %54, %cst_30 {dimension_numbers = #tpu.dot_dimension_numbers<[1], [0], [0], [1], [0, 0, 1, 1], [], []>} : vector<64x32xf32>, vector<32x32xf32>, vector<64x32xf32> -> vector<64x32xf32>
    %78 = vector.extract_strided_slice %77 {offsets = [0, 0], sizes = [32, 32], strides = [1, 1]} : vector<64x32xf32> to vector<32x32xf32>
    %c3_31 = arith.constant 3 : index
    %c0_32 = arith.constant 0 : index
    %79 = vector.load %arg3[%c3_31, %c0_32] : memref<5x32xf32, #tpu.memory_space<vmem>>, vector<1x32xf32>
    %80 = vector.broadcast %79 : vector<1x32xf32> to vector<32x32xf32>
    %81 = arith.mulf %78, %80 : vector<32x32xf32>
    %82 = vector.extract_strided_slice %77 {offsets = [32, 0], sizes = [32, 32], strides = [1, 1]} : vector<64x32xf32> to vector<32x32xf32>
    %c4_33 = arith.constant 4 : index
    %c0_34 = arith.constant 0 : index
    %83 = vector.load %arg3[%c4_33, %c0_34] : memref<5x32xf32, #tpu.memory_space<vmem>>, vector<1x32xf32>
    %84 = vector.broadcast %83 : vector<1x32xf32> to vector<32x32xf32>
    %85 = arith.mulf %82, %84 : vector<32x32xf32>
    %86 = arith.addf %81, %85 : vector<32x32xf32>
    %c0_35 = arith.constant 0 : index
    %c0_36 = arith.constant 0 : index
    %87 = vector.load %arg7[%c0_35, %c0_36] : memref<32x32xf32, #tpu.memory_space<vmem>>, vector<32x32xf32>
    %cst_37 = arith.constant dense<0.000000e+00> : vector<32x32xf32>
    %88 = tpu.matmul %86, %87, %cst_37 {dimension_numbers = #tpu.dot_dimension_numbers<[1], [0], [0], [1], [0, 0, 1, 1], [], []>} : vector<32x32xf32>, vector<32x32xf32>, vector<32x32xf32> -> vector<32x32xf32>
    %89 = vector.broadcast %4 : vector<1x32xf32> to vector<32x32xf32>
    %90 = arith.addf %88, %89 : vector<32x32xf32>
    %91 = arith.addf %90, %0 : vector<32x32xf32>
    %c0_38 = arith.constant 0 : index
    %c0_39 = arith.constant 0 : index
    %92 = vector.load %arg8[%c0_38, %c0_39] : memref<32x32xf32, #tpu.memory_space<vmem>>, vector<32x32xf32>
    tpu.vector_store %arg8[%c0_38, %c0_39], %91 {strides = array<i32>} : memref<32x32xf32, #tpu.memory_space<vmem>>, vector<32x32xf32>,
    return
  }
  func.func @transform_0(%arg0: i32) -> (i32, i32) {
    %c0_i32 = arith.constant 0 : i32
    %c0_i32_0 = arith.constant 0 : i32
    return %arg0, %c0_i32 : i32, i32
  }
  func.func @transform_1(%arg0: i32) -> (i32, i32) {
    %c0_i32 = arith.constant 0 : i32
    %c0_i32_0 = arith.constant 0 : i32
    return %arg0, %c0_i32 : i32, i32
  }
  func.func @transform_2(%arg0: i32) -> (i32, i32) {
    %c0_i32 = arith.constant 0 : i32
    %c0_i32_0 = arith.constant 0 : i32
    %c0_i32_1 = arith.constant 0 : i32
    return %c0_i32, %c0_i32_0 : i32, i32
  }
  func.func @transform_3(%arg0: i32) -> (i32, i32) {
    %c0_i32 = arith.constant 0 : i32
    %c0_i32_0 = arith.constant 0 : i32
    %c0_i32_1 = arith.constant 0 : i32
    return %c0_i32, %c0_i32_0 : i32, i32
  }
  func.func @transform_4(%arg0: i32) -> (i32, i32) {
    %c0_i32 = arith.constant 0 : i32
    %c0_i32_0 = arith.constant 0 : i32
    %c0_i32_1 = arith.constant 0 : i32
    return %c0_i32, %c0_i32_0 : i32, i32
  }
  func.func @transform_5(%arg0: i32) -> (i32, i32) {
    %c0_i32 = arith.constant 0 : i32
    %c0_i32_0 = arith.constant 0 : i32
    %c0_i32_1 = arith.constant 0 : i32
    return %c0_i32, %c0_i32_0 : i32, i32
  }
  func.func @transform_6(%arg0: i32) -> (i32, i32) {
    %c0_i32 = arith.constant 0 : i32
    %c0_i32_0 = arith.constant 0 : i32
    %c0_i32_1 = arith.constant 0 : i32
    return %c0_i32, %c0_i32_0 : i32, i32
  }
  func.func @transform_7(%arg0: i32) -> (i32, i32) {
    %c0_i32 = arith.constant 0 : i32
    %c0_i32_0 = arith.constant 0 : i32
    return %arg0, %c0_i32 : i32, i32
  }
}

</mosaic_0001>

<llo_original>
// kernel: tpu_custom_call.1
$region0: #{tpu_custom_call.1}
  #allocation0 [shape = 'u32[]', space=smem, size = 0x4, offset = 0x4, fixed_abs, tag = 'smem constant byte address 0x4 - core index']
  #allocation1 [shape = 'u32[144,128]{1,0:T(1,128)}', space=vmem, size = 0x12000, scoped, tag = 'internal scratch']
  %s0 = inlined_call_operand.vmem [shape: f32[64,32], index: 0, kind: input, shape index: {}]
  %s1 = inlined_call_operand.vmem [shape: f32[128,32], index: 1, kind: input, shape index: {}]
  %s2 = inlined_call_operand.vmem [shape: f32[5,32], index: 2, kind: input, shape index: {}]
  %s3 = inlined_call_operand.vmem [shape: f32[64,32], index: 3, kind: input, shape index: {}]
  %s4 = inlined_call_operand.vmem [shape: f32[32,32], index: 4, kind: input, shape index: {}]
  %s5 = inlined_call_operand.vmem [shape: f32[32,64], index: 5, kind: input, shape index: {}]
  %s6 = inlined_call_operand.vmem [shape: f32[32,32], index: 6, kind: input, shape index: {}]
  %s7 = inlined_call_operand.vmem [shape: f32[64,32], index: 7, kind: output, shape index: {}]
  %s8 = sld [smem:[#allocation0]]
  $region61: #{tpu_custom_call.1} parent=0
    _
  %s10 = ssub.s32 1, %s8
  %s11 = scalar_select 0, %s10, %s8
  loop: start=0, step=1, limit=4
  $region2: #{tpu_custom_call.1} parent=0 // loop_pre_header
    _
  $region3: #{tpu_custom_call.1} parent=0 // loop_header
    %s13 = sphi 0, %s17
    %p14 = scmp.ge.s32.totalorder %s13, 4
    %s23 = sphi 0, %s25
    %s26 = sphi 0, %s23
    %s27 = sphi 0, %s26
    %s43 = sphi 0, %s27
    %s49 = sphi 0, %s51
    %s52 = sphi 0, %s49
    %s53 = sphi 0, %s52
    %s69 = sphi 0, %s53
    %s73 = sphi 0, %s73
    %s75 = sphi 0, %s73
    %s76 = sphi 0, %s75
    %s90 = sphi 0, %s76
    %s94 = sphi 0, %s94
    %s96 = sphi 0, %s94
    %s97 = sphi 0, %s96
    %s111 = sphi 0, %s97
    %s115 = sphi 0, %s115
    %s117 = sphi 0, %s115
    %s118 = sphi 0, %s117
    %s132 = sphi 0, %s118
    %s136 = sphi 0, %s136
    %s138 = sphi 0, %s136
    %s139 = sphi 0, %s138
    %s153 = sphi 0, %s139
    %s157 = sphi 0, %s157
    %s159 = sphi 0, %s157
    %s160 = sphi 0, %s159
    %s174 = sphi 0, %s160
    %s180 = sphi 0, %s182
    %s183 = sphi 0, %s180
    %s184 = sphi 0, %s183
    %s200 = sphi 0, %s184
  $region4: #{tpu_custom_call.1} parent=0 // loop_header_branch
    %16 = sbr.rel (%p14) target = $region8
  $region5: #{tpu_custom_call.1} parent=0 // loop_body
    %s18 = ssub.s32 %s13, 1
    %s19 = ssub.s32 %s13, 2
    %s20 = sadd.s32 %s13, 1
    %s21 = ssub.s32 %s13, %s20
    %p22 = scmp.eq.s32.totalorder %s21, 0
    %s24 = sadd.s32 %s23, 1
    %s25 = scalar_select %p22, %s23, %s24
    %p28 = pneg %p22
    %p29 = scmp.eq.s32.totalorder %s13, 1
    %p30 = por %p28, %p29
    %p31 = scmp.ne.s32.totalorder %s23, %s26
    %p32 = scmp.eq.s32.totalorder %s13, 0
    %p33 = por %p31, %p32
    %p34 = scmp.ne.s32.totalorder %s23, %s26
    %p35 = scmp.eq.s32.totalorder %s18, 1
    %p36 = por %p34, %p35
    %p37 = scmp.ne.s32.totalorder %s26, %s27
    %p38 = scmp.eq.s32.totalorder %s18, 0
    %p39 = por %p37, %p38
    %p40 = scmp.ne.s32.totalorder %s26, %s27
    %p41 = scmp.eq.s32.totalorder %s19, 1
    %p42 = por %p40, %p41
    %p44 = scmp.ne.s32.totalorder %s27, %s43
    %p45 = scmp.eq.s32.totalorder %s19, 0
    %p46 = por %p44, %p45
    %s47 = ssub.s32 %s13, %s20
    %p48 = scmp.eq.s32.totalorder %s47, 0
    %s50 = sadd.s32 %s49, 1
    %s51 = scalar_select %p48, %s49, %s50
    %p54 = pneg %p48
    %p55 = scmp.eq.s32.totalorder %s13, 1
    %p56 = por %p54, %p55
    %p57 = scmp.ne.s32.totalorder %s49, %s52
    %p58 = scmp.eq.s32.totalorder %s13, 0
    %p59 = por %p57, %p58
    %p60 = scmp.ne.s32.totalorder %s49, %s52
    %p61 = scmp.eq.s32.totalorder %s18, 1
    %p62 = por %p60, %p61
    %p63 = scmp.ne.s32.totalorder %s52, %s53
    %p64 = scmp.eq.s32.totalorder %s18, 0
    %p65 = por %p63, %p64
    %p66 = scmp.ne.s32.totalorder %s52, %s53
    %p67 = scmp.eq.s32.totalorder %s19, 1
    %p68 = por %p66, %p67
    %p70 = scmp.ne.s32.totalorder %s53, %s69
    %p71 = scmp.eq.s32.totalorder %s19, 0
    %p72 = por %p70, %p71
    %s74 = sadd.s32 %s73, 1
    %p77 = scmp.eq.s32.totalorder %s13, 1
    %p78 = scmp.ne.s32.totalorder %s73, %s75
    %p79 = scmp.eq.s32.totalorder %s13, 0
    %p80 = por %p78, %p79
    %p81 = scmp.ne.s32.totalorder %s73, %s75
    %p82 = scmp.eq.s32.totalorder %s18, 1
    %p83 = por %p81, %p82
    %p84 = scmp.ne.s32.totalorder %s75, %s76
    %p85 = scmp.eq.s32.totalorder %s18, 0
    %p86 = por %p84, %p85
    %p87 = scmp.ne.s32.totalorder %s75, %s76
    %p88 = scmp.eq.s32.totalorder %s19, 1
    %p89 = por %p87, %p88
    %p91 = scmp.ne.s32.totalorder %s76, %s90
    %p92 = scmp.eq.s32.totalorder %s19, 0
    %p93 = por %p91, %p92
    %s95 = sadd.s32 %s94, 1
    %p98 = scmp.eq.s32.totalorder %s13, 1
    %p99 = scmp.ne.s32.totalorder %s94, %s96
    %p100 = scmp.eq.s32.totalorder %s13, 0
    %p101 = por %p99, %p100
    %p102 = scmp.ne.s32.totalorder %s94, %s96
    %p103 = scmp.eq.s32.totalorder %s18, 1
    %p104 = por %p102, %p103
    %p105 = scmp.ne.s32.totalorder %s96, %s97
    %p106 = scmp.eq.s32.totalorder %s18, 0
    %p107 = por %p105, %p106
    %p108 = scmp.ne.s32.totalorder %s96, %s97
    %p109 = scmp.eq.s32.totalorder %s19, 1
    %p110 = por %p108, %p109
    %p112 = scmp.ne.s32.totalorder %s97, %s111
    %p113 = scmp.eq.s32.totalorder %s19, 0
    %p114 = por %p112, %p113
    %s116 = sadd.s32 %s115, 1
    %p119 = scmp.eq.s32.totalorder %s13, 1
    %p120 = scmp.ne.s32.totalorder %s115, %s117
    %p121 = scmp.eq.s32.totalorder %s13, 0
    %p122 = por %p120, %p121
    %p123 = scmp.ne.s32.totalorder %s115, %s117
    %p124 = scmp.eq.s32.totalorder %s18, 1
    %p125 = por %p123, %p124
    %p126 = scmp.ne.s32.totalorder %s117, %s118
    %p127 = scmp.eq.s32.totalorder %s18, 0
    %p128 = por %p126, %p127
    %p129 = scmp.ne.s32.totalorder %s117, %s118
    %p130 = scmp.eq.s32.totalorder %s19, 1
    %p131 = por %p129, %p130
    %p133 = scmp.ne.s32.totalorder %s118, %s132
    %p134 = scmp.eq.s32.totalorder %s19, 0
    %p135 = por %p133, %p134
    %s137 = sadd.s32 %s136, 1
    %p140 = scmp.eq.s32.totalorder %s13, 1
    %p141 = scmp.ne.s32.totalorder %s136, %s138
    %p142 = scmp.eq.s32.totalorder %s13, 0
    %p143 = por %p141, %p142
    %p144 = scmp.ne.s32.totalorder %s136, %s138
    %p145 = scmp.eq.s32.totalorder %s18, 1
    %p146 = por %p144, %p145
    %p147 = scmp.ne.s32.totalorder %s138, %s139
    %p148 = scmp.eq.s32.totalorder %s18, 0
    %p149 = por %p147, %p148
    %p150 = scmp.ne.s32.totalorder %s138, %s139
    %p151 = scmp.eq.s32.totalorder %s19, 1
    %p152 = por %p150, %p151
    %p154 = scmp.ne.s32.totalorder %s139, %s153
    %p155 = scmp.eq.s32.totalorder %s19, 0
    %p156 = por %p154, %p155
    %s158 = sadd.s32 %s157, 1
    %p161 = scmp.eq.s32.totalorder %s13, 1
    %p162 = scmp.ne.s32.totalorder %s157, %s159
    %p163 = scmp.eq.s32.totalorder %s13, 0
    %p164 = por %p162, %p163
    %p165 = scmp.ne.s32.totalorder %s157, %s159
    %p166 = scmp.eq.s32.totalorder %s18, 1
    %p167 = por %p165, %p166
    %p168 = scmp.ne.s32.totalorder %s159, %s160
    %p169 = scmp.eq.s32.totalorder %s18, 0
    %p170 = por %p168, %p169
    %p171 = scmp.ne.s32.totalorder %s159, %s160
    %p172 = scmp.eq.s32.totalorder %s19, 1
    %p173 = por %p171, %p172
    %p175 = scmp.ne.s32.totalorder %s160, %s174
    %p176 = scmp.eq.s32.totalorder %s19, 0
    %p177 = por %p175, %p176
    %s178 = ssub.s32 %s13, %s20
    %p179 = scmp.eq.s32.totalorder %s178, 0
    %s181 = sadd.s32 %s180, 1
    %s182 = scalar_select %p179, %s180, %s181
    %p185 = pneg %p179
    %p186 = scmp.eq.s32.totalorder %s13, 1
    %p187 = por %p185, %p186
    %p188 = scmp.ne.s32.totalorder %s180, %s183
    %p189 = scmp.eq.s32.totalorder %s13, 0
    %p190 = por %p188, %p189
    %p191 = scmp.ne.s32.totalorder %s180, %s183
    %p192 = scmp.eq.s32.totalorder %s18, 1
    %p193 = por %p191, %p192
    %p194 = scmp.ne.s32.totalorder %s183, %s184
    %p195 = scmp.eq.s32.totalorder %s18, 0
    %p196 = por %p194, %p195
    %p197 = scmp.ne.s32.totalorder %s183, %s184
    %p198 = scmp.eq.s32.totalorder %s19, 1
    %p199 = por %p197, %p198
    %p201 = scmp.ne.s32.totalorder %s184, %s200
    %p202 = scmp.eq.s32.totalorder %s19, 0
    %p203 = por %p201, %p202
    %p204 = scmp.le.s32.totalorder 1, %s13
    %p205 = scmp.lt.s32.totalorder %s13, 3
    %p206 = pnand %p204, %p205
    %p207 = pneg %p206
    // Predicated region
    $region9: #{tpu_custom_call.1} parent=5 // pred_check
      _
    $region10: #{tpu_custom_call.1} parent=5 // pred_check_branch
      %209 = sbr.rel (%p206) target = $region12
    $region11: #{tpu_custom_call.1} parent=5 // pred_region
      %s210 = ssub.s32 %s13, 1
      // Predicated region
      $region13: #{tpu_custom_call.1} parent=11 // pred_check
        %p211 = pneg %p86
      $region14: #{tpu_custom_call.1} parent=11 // pred_check_branch
        %213 = sbr.rel (%p211) target = $region16
      $region15: #{tpu_custom_call.1} parent=11 // pred_region
        _
      $region16: #{tpu_custom_call.1} parent=11 // pred_fallthru
        _
      // Predicated region
      $region17: #{tpu_custom_call.1} parent=11 // pred_check
        %p214 = pneg %p107
      $region18: #{tpu_custom_call.1} parent=11 // pred_check_branch
        %216 = sbr.rel (%p214) target = $region20
      $region19: #{tpu_custom_call.1} parent=11 // pred_region
        _
      $region20: #{tpu_custom_call.1} parent=11 // pred_fallthru
        _
      // Predicated region
      $region21: #{tpu_custom_call.1} parent=11 // pred_check
        %p217 = pneg %p128
      $region22: #{tpu_custom_call.1} parent=11 // pred_check_branch
        %219 = sbr.rel (%p217) target = $region24
      $region23: #{tpu_custom_call.1} parent=11 // pred_region
        _
      $region24: #{tpu_custom_call.1} parent=11 // pred_fallthru
        _
      // Predicated region
      $region25: #{tpu_custom_call.1} parent=11 // pred_check
        %p220 = pneg %p149
      $region26: #{tpu_custom_call.1} parent=11 // pred_check_branch
        %222 = sbr.rel (%p220) target = $region28
      $region27: #{tpu_custom_call.1} parent=11 // pred_region
        _
      $region28: #{tpu_custom_call.1} parent=11 // pred_fallthru
        _
      // Predicated region
      $region29: #{tpu_custom_call.1} parent=11 // pred_check
        %p223 = pneg %p170
      $region30: #{tpu_custom_call.1} parent=11 // pred_check_branch
        %225 = sbr.rel (%p223) target = $region32
      $region31: #{tpu_custom_call.1} parent=11 // pred_region
        _
      $region32: #{tpu_custom_call.1} parent=11 // pred_fallthru
        _
    $region12: #{tpu_custom_call.1} parent=5 // pred_fallthru
      _
    %p226 = scmp.lt.s32.totalorder %s13, 2
    // Predicated region
    $region33: #{tpu_custom_call.1} parent=5 // pred_check
      %p227 = pneg %p226
    $region34: #{tpu_custom_call.1} parent=5 // pred_check_branch
      %229 = sbr.rel (%p227) target = $region36
    $region35: #{tpu_custom_call.1} parent=5 // pred_region
      // Predicated region
      $region37: #{tpu_custom_call.1} parent=35 // pred_check
        %p230 = pneg %p33
      $region38: #{tpu_custom_call.1} parent=35 // pred_check_branch
        %232 = sbr.rel (%p230) target = $region40
      $region39: #{tpu_custom_call.1} parent=35 // pred_region
        %s233 = smul.u32 4, %s13
        %p234 = scmp.lt.s32.totalorder %s233, 7
        %s235 = scalar_select %p234, %s233, 7
        %s236 = smul.addr %s235, 8
        %s237 = scalar_lea.vmem %s0, %s236
        %s238 = smul.u32 4, %s13
      $region40: #{tpu_custom_call.1} parent=35 // pred_fallthru
        _
      // Predicated region
      $region41: #{tpu_custom_call.1} parent=35 // pred_check
        %p239 = pneg %p59
      $region42: #{tpu_custom_call.1} parent=35 // pred_check_branch
        %241 = sbr.rel (%p239) target = $region44
      $region43: #{tpu_custom_call.1} parent=35 // pred_region
        %s242 = smul.u32 8, %s13
        %p243 = scmp.lt.s32.totalorder %s242, 15
        %s244 = scalar_select %p243, %s242, 15
        %s245 = smul.addr %s244, 8
        %s246 = scalar_lea.vmem %s1, %s245
        %s247 = smul.u32 8, %s13
      $region44: #{tpu_custom_call.1} parent=35 // pred_fallthru
        _
    $region36: #{tpu_custom_call.1} parent=5 // pred_fallthru
      _
    %p248 = scmp.le.s32.totalorder 1, %s13
    %p249 = scmp.lt.s32.totalorder %s13, 3
    %p250 = pnand %p248, %p249
    %p251 = pneg %p250
    // Predicated region
    $region45: #{tpu_custom_call.1} parent=5 // pred_check
      _
    $region46: #{tpu_custom_call.1} parent=5 // pred_check_branch
      %253 = sbr.rel (%p250) target = $region48
    $region47: #{tpu_custom_call.1} parent=5 // pred_region
      %s254 = ssub.s32 %s13, 1
      %s255 = smul.u32 4, %s18
      %p256 = scmp.lt.s32.totalorder %s255, 7
      %s257 = scalar_select %p256, %s255, 7
      %s258 = smul.addr %s257, 8
      %s259 = scalar_lea.vmem %s0, %s258
      %p260 = pneg %p39
      %p261 = pneg %p36
      %s262 = smul.u32 8, %s18
      %p263 = scmp.lt.s32.totalorder %s262, 15
      %s264 = scalar_select %p263, %s262, 15
      %s265 = smul.addr %s264, 8
      %s266 = scalar_lea.vmem %s1, %s265
      %p267 = pneg %p65
      %p268 = pneg %p62
      %p269 = pneg %p86
      %p270 = pneg %p83
      %p271 = pneg %p107
      %p272 = pneg %p104
      %p273 = pneg %p128
      %p274 = pneg %p125
      %p275 = pneg %p149
      %p276 = pneg %p146
      %p277 = pneg %p170
      %p278 = pneg %p167
      %p279 = pneg %p196
      %p280 = pneg %p193
      %s281 = smul.u32 4, %s18
      %p282 = scmp.lt.s32.totalorder %s281, 7
      %s283 = scalar_select %p282, %s281, 7
      %s284 = smul.addr %s283, 8
      %s285 = scalar_lea.vmem %s7, %s284
      %s286 = smul.u32 4, %s18
      %p287 = scmp.lt.s32.totalorder %s286, 7
      %s288 = scalar_select %p287, %s286, 7
      %s289 = smul.addr %s288, 8
      %s290 = scalar_lea.vmem %s0, %s289
      %s291 = smul.u32 4, %s18
      %s292 = smul.u32 8, %s18
      %p293 = scmp.lt.s32.totalorder %s292, 15
      %s294 = scalar_select %p293, %s292, 15
      %s295 = smul.addr %s294, 8
      %s296 = scalar_lea.vmem %s1, %s295
      %s297 = smul.u32 8, %s18
      %s298 = smul.u32 4, %s18
      %p299 = scmp.lt.s32.totalorder %s298, 7
      %s300 = scalar_select %p299, %s298, 7
      %s301 = smul.addr %s300, 8
      %s302 = scalar_lea.vmem %s7, %s301
      %s303 = smul.u32 4, %s18
      %v304 = vld [vmem:[%s290] sm:$0xff]
      %v305 = vld [vmem:[%s290 + $0x8] sm:$0xff]
      %v306 = vld [vmem:[%s290 + $0x10] sm:$0xff]
      %v307 = vld [vmem:[%s290 + $0x18] sm:$0xff]
      %v308 = vld [vmem:[%s296] sm:$0xff]
      %v309 = vld [vmem:[%s296 + $0x8] sm:$0xff]
      %v310 = vld [vmem:[%s296 + $0x10] sm:$0xff]
      %v311 = vld [vmem:[%s296 + $0x18] sm:$0xff]
      %v312 = vld [vmem:[%s296 + $0x20] sm:$0xff]
      %v313 = vld [vmem:[%s296 + $0x28] sm:$0xff]
      %v314 = vld [vmem:[%s296 + $0x30] sm:$0xff]
      %v315 = vld [vmem:[%s296 + $0x38] sm:$0xff]
      %v316 = vld [vmem:[%s2] sm:$0x1]
      %v317 = vld [vmem:[%s2 + $0x1] sm:$0x1]
      %v318 = vld [vmem:[%s2 + $0x2] sm:$0x1]
      %vm319 = vcmask 261120
      %v320 = vsel %vm319, %v304, 0.0
      %321 = vadd.xlane.f32.xlu0 %v320
      %v322 = vpop.xlane.xlu0 %321
      %v323 = vsel %vm319, %v305, 0.0
      %324 = vadd.xlane.f32.xlu0 %v323
      %v325 = vpop.xlane.xlu0 %324
      %v326 = vsel %vm319, %v306, 0.0
      %327 = vadd.xlane.f32.xlu0 %v326
      %v328 = vpop.xlane.xlu0 %327
      %v329 = vsel %vm319, %v307, 0.0
      %330 = vadd.xlane.f32.xlu0 %v329
      %v331 = vpop.xlane.xlu0 %330
      %v332 = vrcp.pop 32.0
      %v333 = vmul.f32 %v322, %v332
      %v334 = vmul.f32 %v325, %v332
      %v335 = vmul.f32 %v328, %v332
      %v336 = vmul.f32 %v331, %v332
      %v337 = vsub.f32 %v304, %v333
      %v338 = vsub.f32 %v305, %v334
      %v339 = vsub.f32 %v306, %v335
      %v340 = vsub.f32 %v307, %v336
      %v341 = vmul.f32 %v337, %v337
      %v342 = vmul.f32 %v338, %v338
      %v343 = vmul.f32 %v339, %v339
      %v344 = vmul.f32 %v340, %v340
      %v345 = vsel %vm319, %v341, 0.0
      %346 = vadd.xlane.f32.xlu0 %v345
      %v347 = vpop.xlane.xlu0 %346
      %v348 = vsel %vm319, %v342, 0.0
      %349 = vadd.xlane.f32.xlu0 %v348
      %v350 = vpop.xlane.xlu0 %349
      %v351 = vsel %vm319, %v343, 0.0
      %352 = vadd.xlane.f32.xlu0 %v351
      %v353 = vpop.xlane.xlu0 %352
      %v354 = vsel %vm319, %v344, 0.0
      %355 = vadd.xlane.f32.xlu0 %v354
      %v356 = vpop.xlane.xlu0 %355
      %v357 = vmul.f32 %v347, %v332
      %v358 = vmul.f32 %v350, %v332
      %v359 = vmul.f32 %v353, %v332
      %v360 = vmul.f32 %v356, %v332
      %v361 = vadd.f32 %v357, 1e-05
      %v362 = vadd.f32 %v358, 1e-05
      %v363 = vadd.f32 %v359, 1e-05
      %v364 = vadd.f32 %v360, 1e-05
      %v365 = vrsqrt.pop %v361
      %v366 = vrsqrt.pop %v362
      %v367 = vrsqrt.pop %v363
      %v368 = vrsqrt.pop %v364
      %v369 = vmul.f32 %v337, %v365
      %v370 = vmul.f32 %v338, %v366
      %v371 = vmul.f32 %v339, %v367
      %v372 = vmul.f32 %v340, %v368
      %v373 = vlaneseq
      %v374 = vshrl.u32 %v373, 7
      %v375 = vsub.s32 0, %v374
      %v376 = vrot.slane %v316, %v375
      %v377 = vmul.f32 %v369, %v376
      %v378 = vmul.f32 %v370, %v376
      %v379 = vmul.f32 %v371, %v376
      %v380 = vmul.f32 %v372, %v376
      %v381 = vlaneseq
      %v382 = vshrl.u32 %v381, 7
      %v383 = vsub.s32 0, %v382
      %v384 = vrot.slane %v317, %v383
      %v385 = vadd.f32 %v377, %v384
      %v386 = vadd.f32 %v378, %v384
      %v387 = vadd.f32 %v379, %v384
      %v388 = vadd.f32 %v380, %v384
      %v389 = vsel %vm319, %v308, 0.0
      %390 = vadd.xlane.f32.xlu0 %v389
      %v391 = vpop.xlane.xlu0 %390
      %v392 = vsel %vm319, %v309, 0.0
      %393 = vadd.xlane.f32.xlu0 %v392
      %v394 = vpop.xlane.xlu0 %393
      %v395 = vsel %vm319, %v310, 0.0
      %396 = vadd.xlane.f32.xlu0 %v395
      %v397 = vpop.xlane.xlu0 %396
      %v398 = vsel %vm319, %v311, 0.0
      %399 = vadd.xlane.f32.xlu0 %v398
      %v400 = vpop.xlane.xlu0 %399
      %v401 = vsel %vm319, %v312, 0.0
      %402 = vadd.xlane.f32.xlu0 %v401
      %v403 = vpop.xlane.xlu0 %402
      %v404 = vsel %vm319, %v313, 0.0
      %405 = vadd.xlane.f32.xlu0 %v404
      %v406 = vpop.xlane.xlu0 %405
      %v407 = vsel %vm319, %v314, 0.0
      %408 = vadd.xlane.f32.xlu0 %v407
      %v409 = vpop.xlane.xlu0 %408
      %v410 = vsel %vm319, %v315, 0.0
      %411 = vadd.xlane.f32.xlu0 %v410
      %v412 = vpop.xlane.xlu0 %411
      %v413 = vmul.f32 %v391, %v332
      %v414 = vmul.f32 %v394, %v332
      %v415 = vmul.f32 %v397, %v332
      %v416 = vmul.f32 %v400, %v332
      %v417 = vmul.f32 %v403, %v332
      %v418 = vmul.f32 %v406, %v332
      %v419 = vmul.f32 %v409, %v332
      %v420 = vmul.f32 %v412, %v332
      %v421 = vsub.f32 %v308, %v413
      %v422 = vsub.f32 %v309, %v414
      %v423 = vsub.f32 %v310, %v415
      %v424 = vsub.f32 %v311, %v416
      %v425 = vsub.f32 %v312, %v417
      %v426 = vsub.f32 %v313, %v418
      %v427 = vsub.f32 %v314, %v419
      %v428 = vsub.f32 %v315, %v420
      %v429 = vmul.f32 %v421, %v421
      %v430 = vmul.f32 %v422, %v422
      %v431 = vmul.f32 %v423, %v423
      %v432 = vmul.f32 %v424, %v424
      %v433 = vmul.f32 %v425, %v425
      %v434 = vmul.f32 %v426, %v426
      %v435 = vmul.f32 %v427, %v427
      %v436 = vmul.f32 %v428, %v428
      %v437 = vsel %vm319, %v429, 0.0
      %438 = vadd.xlane.f32.xlu0 %v437
      %v439 = vpop.xlane.xlu0 %438
      %v440 = vsel %vm319, %v430, 0.0
      %441 = vadd.xlane.f32.xlu0 %v440
      %v442 = vpop.xlane.xlu0 %441
      %v443 = vsel %vm319, %v431, 0.0
      %444 = vadd.xlane.f32.xlu0 %v443
      %v445 = vpop.xlane.xlu0 %444
      %v446 = vsel %vm319, %v432, 0.0
      %447 = vadd.xlane.f32.xlu0 %v446
      %v448 = vpop.xlane.xlu0 %447
      %v449 = vsel %vm319, %v433, 0.0
      %450 = vadd.xlane.f32.xlu0 %v449
      %v451 = vpop.xlane.xlu0 %450
      %v452 = vsel %vm319, %v434, 0.0
      %453 = vadd.xlane.f32.xlu0 %v452
      %v454 = vpop.xlane.xlu0 %453
      %v455 = vsel %vm319, %v435, 0.0
      %456 = vadd.xlane.f32.xlu0 %v455
      %v457 = vpop.xlane.xlu0 %456
      %v458 = vsel %vm319, %v436, 0.0
      %459 = vadd.xlane.f32.xlu0 %v458
      %v460 = vpop.xlane.xlu0 %459
      %v461 = vmul.f32 %v439, %v332
      %v462 = vmul.f32 %v442, %v332
      %v463 = vmul.f32 %v445, %v332
      %v464 = vmul.f32 %v448, %v332
      %v465 = vmul.f32 %v451, %v332
      %v466 = vmul.f32 %v454, %v332
      %v467 = vmul.f32 %v457, %v332
      %v468 = vmul.f32 %v460, %v332
      %v469 = vadd.f32 %v461, 1e-05
      %v470 = vadd.f32 %v462, 1e-05
      %v471 = vadd.f32 %v463, 1e-05
      %v472 = vadd.f32 %v464, 1e-05
      %v473 = vadd.f32 %v465, 1e-05
      %v474 = vadd.f32 %v466, 1e-05
      %v475 = vadd.f32 %v467, 1e-05
      %v476 = vadd.f32 %v468, 1e-05
      %v477 = vrsqrt.pop %v469
      %v478 = vrsqrt.pop %v470
      %v479 = vrsqrt.pop %v471
      %v480 = vrsqrt.pop %v472
      %v481 = vrsqrt.pop %v473
      %v482 = vrsqrt.pop %v474
      %v483 = vrsqrt.pop %v475
      %v484 = vrsqrt.pop %v476
      %v485 = vmul.f32 %v421, %v477
      %v486 = vmul.f32 %v422, %v478
      %v487 = vmul.f32 %v423, %v479
      %v488 = vmul.f32 %v424, %v480
      %v489 = vmul.f32 %v425, %v481
      %v490 = vmul.f32 %v426, %v482
      %v491 = vmul.f32 %v427, %v483
      %v492 = vmul.f32 %v428, %v484
      %v493 = vmul.f32 %v485, %v376
      %v494 = vmul.f32 %v486, %v376
      %v495 = vmul.f32 %v487, %v376
      %v496 = vmul.f32 %v488, %v376
      %v497 = vmul.f32 %v489, %v376
      %v498 = vmul.f32 %v490, %v376
      %v499 = vmul.f32 %v491, %v376
      %v500 = vmul.f32 %v492, %v376
      %v501 = vadd.f32 %v493, %v384
      %v502 = vadd.f32 %v494, %v384
      %v503 = vadd.f32 %v495, %v384
      %v504 = vadd.f32 %v496, %v384
      %v505 = vadd.f32 %v497, %v384
      %v506 = vadd.f32 %v498, %v384
      %v507 = vadd.f32 %v499, %v384
      %v508 = vadd.f32 %v500, %v384
      %v509 = vld [vmem:[%s4] sm:$0xff]
      %v510 = vld [vmem:[%s4 + $0x8] sm:$0xff]
      %v511 = vld [vmem:[%s4 + $0x10] sm:$0xff]
      %v512 = vld [vmem:[%s4 + $0x18] sm:$0xff]
      %v514 = vsel %vm319, %v385, 0
      %v517 = vsel %vm319, %v386, 0
      %v520 = vsel %vm319, %v387, 0
      %v523 = vsel %vm319, %v388, 0
      %525 = vmatprep.subr.mxu0 0.0
      %526 = vmatpush1.msra.mxu0 %v509
      %527 = vmatprep.subr.mxu0 0.0
      %528 = vmatpush1.msra.mxu0 %v510
      %529 = vmatprep.subr.mxu0 0.0
      %530 = vmatpush1.msra.mxu0 %v511
      %531 = vmatprep.subr.mxu0 0.0
      %532 = vmatpush1.msra.mxu0 %v512
      %533 = vmatprep.subr.mxu0 0.0
      %534 = vmatpush1.msra.mxu0 0.0
      %535 = vmatprep.subr.mxu0 0.0
      %536 = vmatpush1.msra.mxu0 0.0
      %537 = vmatprep.subr.mxu0 0.0
      %538 = vmatpush1.msra.mxu0 0.0
      %539 = vmatprep.subr.mxu0 0.0
      %540 = vmatpush1.msra.mxu0 0.0
      %541 = vmatprep.subr.mxu0 0.0
      %542 = vmatpush1.msra.mxu0 0.0
      %543 = vmatprep.subr.mxu0 0.0
      %544 = vmatpush1.msra.mxu0 0.0
      %545 = vmatprep.subr.mxu0 0.0
      %546 = vmatpush1.msra.mxu0 0.0
      %547 = vmatprep.subr.mxu0 0.0
      %548 = vmatpush1.msra.mxu0 0.0
      %549 = vmatprep.subr.mxu0 0.0
      %550 = vmatpush1.msra.mxu0 0.0
      %551 = vmatprep.subr.mxu0 0.0
      %552 = vmatpush1.msra.mxu0 0.0
      %553 = vmatprep.subr.mxu0 0.0
      %554 = vmatpush1.msra.mxu0 0.0
      %555 = vmatprep.subr.mxu0 0.0
      %556 = vmatpush1.msra.mxu0 0.0
      %557 = vmatprep.subr.mxu0 0.0
      %558 = vmatpush1.msra.mxu0 0.0
      %559 = vmatprep.subr.mxu0 0.0
      %560 = vmatpush1.msra.mxu0 0.0
      %561 = vmatprep.subr.mxu0 0.0
      %562 = vmatpush1.msra.mxu0 0.0
      %563 = vmatprep.subr.mxu0 0.0
      %564 = vmatpush1.msra.mxu0 0.0
      %565 = vmatprep.subr.mxu0 0.0
      %566 = vmatpush1.msra.mxu0 0.0
      %567 = vmatprep.subr.mxu0 0.0
      %568 = vmatpush1.msra.mxu0 0.0
      %569 = vmatprep.subr.mxu0 0.0
      %570 = vmatpush1.msra.mxu0 0.0
      %571 = vmatprep.subr.mxu0 0.0
      %572 = vmatpush1.msra.mxu0 0.0
      %573 = vmatprep.subr.mxu0 0.0
      %574 = vmatpush1.msra.mxu0 0.0
      %575 = vmatprep.subr.mxu0 0.0
      %576 = vmatpush1.msra.mxu0 0.0
      %577 = vmatprep.subr.mxu0 0.0
      %578 = vmatpush1.msra.mxu0 0.0
      %579 = vmatprep.subr.mxu0 0.0
      %580 = vmatpush1.msra.mxu0 0.0
      %581 = vmatprep.subr.mxu0 0.0
      %582 = vmatpush1.msra.mxu0 0.0
      %583 = vmatprep.subr.mxu0 0.0
      %584 = vmatpush1.msra.mxu0 0.0
      %585 = vmatprep.subr.mxu0 0.0
      %586 = vmatpush1.msra.mxu0 0.0
      %587 = vmatprep.subr.mxu0 0.0
      %588 = vmatpush1.msra.mxu0 0.0
      %589 = vmatprep.mubr.f32.mxu0 0.0
      %590 = vmatmul.mubr.f32.gmra.mrb[0].mxu0 %v514
      %v591 = vpop.f32.mrb[0].mxu0
      %v592 = vadd.f32 0.0, %v591
      %v593 = vpop.f32.mrb[0].mxu0
      %594 = vmatprep.mubr.f32.mxu0 0.0
      %595 = vmatmul.mubr.f32.gmra.mrb[0].mxu0 %v517
      %v596 = vpop.f32.mrb[0].mxu0
      %v597 = vadd.f32 0.0, %v596
      %v598 = vpop.f32.mrb[0].mxu0
      %599 = vmatprep.mubr.f32.mxu0 0.0
      %600 = vmatmul.mubr.f32.gmra.mrb[0].mxu0 %v520
      %v601 = vpop.f32.mrb[0].mxu0
      %v602 = vadd.f32 0.0, %v601
      %v603 = vpop.f32.mrb[0].mxu0
      %604 = vmatprep.mubr.f32.mxu0 0.0
      %605 = vmatmul.mubr.f32.gmra.mrb[0].mxu0 %v523
      %v606 = vpop.f32.mrb[0].mxu0
      %v607 = vadd.f32 0.0, %v606
      %v608 = vpop.f32.mrb[0].mxu0
      %609 = vdwg.mxu0
      %v610 = vld [vmem:[%s5] sm:$0xff]
      %v611 = vld [vmem:[%s5 + $0x8] sm:$0xff]
      %v612 = vld [vmem:[%s5 + $0x10] sm:$0xff]
      %v613 = vld [vmem:[%s5 + $0x18] sm:$0xff]
      %v615 = vsel %vm319, %v501, 0
      %v618 = vsel %vm319, %v502, 0
      %v621 = vsel %vm319, %v503, 0
      %v624 = vsel %vm319, %v504, 0
      %v627 = vsel %vm319, %v505, 0
      %v630 = vsel %vm319, %v506, 0
      %v633 = vsel %vm319, %v507, 0
      %v636 = vsel %vm319, %v508, 0
      %638 = vmatprep.subr.mxu0 0.0
      %639 = vmatpush1.msra.mxu0 %v610
      %640 = vmatprep.subr.mxu0 0.0
      %641 = vmatpush1.msra.mxu0 %v611
      %642 = vmatprep.subr.mxu0 0.0
      %643 = vmatpush1.msra.mxu0 %v612
      %644 = vmatprep.subr.mxu0 0.0
      %645 = vmatpush1.msra.mxu0 %v613
      %646 = vmatprep.subr.mxu0 0.0
      %647 = vmatpush1.msra.mxu0 0.0
      %648 = vmatprep.subr.mxu0 0.0
      %649 = vmatpush1.msra.mxu0 0.0
      %650 = vmatprep.subr.mxu0 0.0
      %651 = vmatpush1.msra.mxu0 0.0
      %652 = vmatprep.subr.mxu0 0.0
      %653 = vmatpush1.msra.mxu0 0.0
      %654 = vmatprep.subr.mxu0 0.0
      %655 = vmatpush1.msra.mxu0 0.0
      %656 = vmatprep.subr.mxu0 0.0
      %657 = vmatpush1.msra.mxu0 0.0
      %658 = vmatprep.subr.mxu0 0.0
      %659 = vmatpush1.msra.mxu0 0.0
      %660 = vmatprep.subr.mxu0 0.0
      %661 = vmatpush1.msra.mxu0 0.0
      %662 = vmatprep.subr.mxu0 0.0
      %663 = vmatpush1.msra.mxu0 0.0
      %664 = vmatprep.subr.mxu0 0.0
      %665 = vmatpush1.msra.mxu0 0.0
      %666 = vmatprep.subr.mxu0 0.0
      %667 = vmatpush1.msra.mxu0 0.0
      %668 = vmatprep.subr.mxu0 0.0
      %669 = vmatpush1.msra.mxu0 0.0
      %670 = vmatprep.subr.mxu0 0.0
      %671 = vmatpush1.msra.mxu0 0.0
      %672 = vmatprep.subr.mxu0 0.0
      %673 = vmatpush1.msra.mxu0 0.0
      %674 = vmatprep.subr.mxu0 0.0
      %675 = vmatpush1.msra.mxu0 0.0
      %676 = vmatprep.subr.mxu0 0.0
      %677 = vmatpush1.msra.mxu0 0.0
      %678 = vmatprep.subr.mxu0 0.0
      %679 = vmatpush1.msra.mxu0 0.0
      %680 = vmatprep.subr.mxu0 0.0
      %681 = vmatpush1.msra.mxu0 0.0
      %682 = vmatprep.subr.mxu0 0.0
      %683 = vmatpush1.msra.mxu0 0.0
      %684 = vmatprep.subr.mxu0 0.0
      %685 = vmatpush1.msra.mxu0 0.0
      %686 = vmatprep.subr.mxu0 0.0
      %687 = vmatpush1.msra.mxu0 0.0
      %688 = vmatprep.subr.mxu0 0.0
      %689 = vmatpush1.msra.mxu0 0.0
      %690 = vmatprep.subr.mxu0 0.0
      %691 = vmatpush1.msra.mxu0 0.0
      %692 = vmatprep.subr.mxu0 0.0
      %693 = vmatpush1.msra.mxu0 0.0
      %694 = vmatprep.subr.mxu0 0.0
      %695 = vmatpush1.msra.mxu0 0.0
      %696 = vmatprep.subr.mxu0 0.0
      %697 = vmatpush1.msra.mxu0 0.0
      %698 = vmatprep.subr.mxu0 0.0
      %699 = vmatpush1.msra.mxu0 0.0
      %700 = vmatprep.subr.mxu0 0.0
      %701 = vmatpush1.msra.mxu0 0.0
      %702 = vmatprep.mubr.f32.mxu0 0.0
      %703 = vmatmul.mubr.f32.gmra.mrb[0].mxu0 %v615
      %v704 = vpop.f32.mrb[0].mxu0
      %v705 = vadd.f32 0.0, %v704
      %v706 = vpop.f32.mrb[0].mxu0
      %707 = vmatprep.mubr.f32.mxu0 0.0
      %708 = vmatmul.mubr.f32.gmra.mrb[0].mxu0 %v618
      %v709 = vpop.f32.mrb[0].mxu0
      %v710 = vadd.f32 0.0, %v709
      %v711 = vpop.f32.mrb[0].mxu0
      %712 = vmatprep.mubr.f32.mxu0 0.0
      %713 = vmatmul.mubr.f32.gmra.mrb[0].mxu0 %v621
      %v714 = vpop.f32.mrb[0].mxu0
      %v715 = vadd.f32 0.0, %v714
      %v716 = vpop.f32.mrb[0].mxu0
      %717 = vmatprep.mubr.f32.mxu0 0.0
      %718 = vmatmul.mubr.f32.gmra.mrb[0].mxu0 %v624
      %v719 = vpop.f32.mrb[0].mxu0
      %v720 = vadd.f32 0.0, %v719
      %v721 = vpop.f32.mrb[0].mxu0
      %722 = vmatprep.mubr.f32.mxu0 0.0
      %723 = vmatmul.mubr.f32.gmra.mrb[0].mxu0 %v627
      %v724 = vpop.f32.mrb[0].mxu0
      %v725 = vadd.f32 0.0, %v724
      %v726 = vpop.f32.mrb[0].mxu0
      %727 = vmatprep.mubr.f32.mxu0 0.0
      %728 = vmatmul.mubr.f32.gmra.mrb[0].mxu0 %v630
      %v729 = vpop.f32.mrb[0].mxu0
      %v730 = vadd.f32 0.0, %v729
      %v731 = vpop.f32.mrb[0].mxu0
      %732 = vmatprep.mubr.f32.mxu0 0.0
      %733 = vmatmul.mubr.f32.gmra.mrb[0].mxu0 %v633
      %v734 = vpop.f32.mrb[0].mxu0
      %v735 = vadd.f32 0.0, %v734
      %v736 = vpop.f32.mrb[0].mxu0
      %737 = vmatprep.mubr.f32.mxu0 0.0
      %738 = vmatmul.mubr.f32.gmra.mrb[0].mxu0 %v636
      %v739 = vpop.f32.mrb[0].mxu0
      %v740 = vadd.f32 0.0, %v739
      %v741 = vpop.f32.mrb[0].mxu0
      %742 = vdwg.mxu0
      %v743 = vld [vmem:[%s2 + $0x3] sm:$0x1]
      %v744 = vlaneseq
      %v745 = vshrl.u32 %v744, 7
      %v746 = vsub.s32 0, %v745
      %v747 = vrot.slane %v743, %v746
      %v748 = vmul.f32 %v592, %v747
      %v749 = vmul.f32 %v597, %v747
      %v750 = vmul.f32 %v602, %v747
      %v751 = vmul.f32 %v607, %v747
      %v752 = vld [vmem:[%s2 + $0x4] sm:$0x1]
      %v753 = vlaneseq
      %v754 = vshrl.u32 %v753, 7
      %v755 = vsub.s32 0, %v754
      %v756 = vrot.slane %v752, %v755
      %v757 = vmul.f32 %v592, %v756
      %v758 = vmul.f32 %v597, %v756
      %v759 = vmul.f32 %v602, %v756
      %v760 = vmul.f32 %v607, %v756
      %v762 = vsel %vm319, %v748, 0
      %v765 = vsel %vm319, %v749, 0
      %v768 = vsel %vm319, %v750, 0
      %v771 = vsel %vm319, %v751, 0
      %v774 = vsel %vm319, %v757, 0
      %v777 = vsel %vm319, %v758, 0
      %v780 = vsel %vm319, %v759, 0
      %v783 = vsel %vm319, %v760, 0
      %v786 = vsel %vm319, %v705, 0
      %v789 = vsel %vm319, %v710, 0
      %v792 = vsel %vm319, %v715, 0
      %v795 = vsel %vm319, %v720, 0
      %797 = vmatprep.subr.mxu0 0.0
      %798 = vmatpush1.xpose.msra.mxu0 %v786
      %799 = vmatprep.subr.mxu0 0.0
      %800 = vmatpush1.xpose.msra.mxu0 %v789
      %801 = vmatprep.subr.mxu0 0.0
      %802 = vmatpush1.xpose.msra.mxu0 %v792
      %803 = vmatprep.subr.mxu0 0.0
      %804 = vmatpush1.xpose.msra.mxu0 %v795
      %805 = vmatprep.subr.mxu0 0.0
      %806 = vmatpush1.xpose.msra.mxu0 0.0
      %807 = vmatprep.subr.mxu0 0.0
      %808 = vmatpush1.xpose.msra.mxu0 0.0
      %809 = vmatprep.subr.mxu0 0.0
      %810 = vmatpush1.xpose.msra.mxu0 0.0
      %811 = vmatprep.subr.mxu0 0.0
      %812 = vmatpush1.xpose.msra.mxu0 0.0
      %813 = vmatprep.subr.mxu0 0.0
      %814 = vmatpush1.xpose.msra.mxu0 0.0
      %815 = vmatprep.subr.mxu0 0.0
      %816 = vmatpush1.xpose.msra.mxu0 0.0
      %817 = vmatprep.subr.mxu0 0.0
      %818 = vmatpush1.xpose.msra.mxu0 0.0
      %819 = vmatprep.subr.mxu0 0.0
      %820 = vmatpush1.xpose.msra.mxu0 0.0
      %821 = vmatprep.subr.mxu0 0.0
      %822 = vmatpush1.xpose.msra.mxu0 0.0
      %823 = vmatprep.subr.mxu0 0.0
      %824 = vmatpush1.xpose.msra.mxu0 0.0
      %825 = vmatprep.subr.mxu0 0.0
      %826 = vmatpush1.xpose.msra.mxu0 0.0
      %827 = vmatprep.subr.mxu0 0.0
      %828 = vmatpush1.xpose.msra.mxu0 0.0
      %829 = vmatprep.subr.mxu0 0.0
      %830 = vmatpush1.xpose.msra.mxu0 0.0
      %831 = vmatprep.subr.mxu0 0.0
      %832 = vmatpush1.xpose.msra.mxu0 0.0
      %833 = vmatprep.subr.mxu0 0.0
      %834 = vmatpush1.xpose.msra.mxu0 0.0
      %835 = vmatprep.subr.mxu0 0.0
      %836 = vmatpush1.xpose.msra.mxu0 0.0
      %837 = vmatprep.subr.mxu0 0.0
      %838 = vmatpush1.xpose.msra.mxu0 0.0
      %839 = vmatprep.subr.mxu0 0.0
      %840 = vmatpush1.xpose.msra.mxu0 0.0
      %841 = vmatprep.subr.mxu0 0.0
      %842 = vmatpush1.xpose.msra.mxu0 0.0
      %843 = vmatprep.subr.mxu0 0.0
      %844 = vmatpush1.xpose.msra.mxu0 0.0
      %845 = vmatprep.subr.mxu0 0.0
      %846 = vmatpush1.xpose.msra.mxu0 0.0
      %847 = vmatprep.subr.mxu0 0.0
      %848 = vmatpush1.xpose.msra.mxu0 0.0
      %849 = vmatprep.subr.mxu0 0.0
      %850 = vmatpush1.xpose.msra.mxu0 0.0
      %851 = vmatprep.subr.mxu0 0.0
      %852 = vmatpush1.xpose.msra.mxu0 0.0
      %853 = vmatprep.subr.mxu0 0.0
      %854 = vmatpush1.xpose.msra.mxu0 0.0
      %855 = vmatprep.subr.mxu0 0.0
      %856 = vmatpush1.xpose.msra.mxu0 0.0
      %857 = vmatprep.subr.mxu0 0.0
      %858 = vmatpush1.xpose.msra.mxu0 0.0
      %859 = vmatprep.subr.mxu0 0.0
      %860 = vmatpush1.xpose.msra.mxu0 0.0
      %861 = vmatprep.mubr.f32.mxu0 0.0
      %862 = vmatmul.mubr.f32.gmra.mrb[0].mxu0 %v762
      %v863 = vpop.f32.mrb[0].mxu0
      %v864 = vadd.f32 0.0, %v863
      %v865 = vpop.f32.mrb[0].mxu0
      %866 = vmatprep.mubr.f32.mxu0 0.0
      %867 = vmatmul.mubr.f32.gmra.mrb[0].mxu0 %v765
      %v868 = vpop.f32.mrb[0].mxu0
      %v869 = vadd.f32 0.0, %v868
      %v870 = vpop.f32.mrb[0].mxu0
      %871 = vmatprep.mubr.f32.mxu0 0.0
      %872 = vmatmul.mubr.f32.gmra.mrb[0].mxu0 %v768
      %v873 = vpop.f32.mrb[0].mxu0
      %v874 = vadd.f32 0.0, %v873
      %v875 = vpop.f32.mrb[0].mxu0
      %876 = vmatprep.mubr.f32.mxu0 0.0
      %877 = vmatmul.mubr.f32.gmra.mrb[0].mxu0 %v771
      %v878 = vpop.f32.mrb[0].mxu0
      %v879 = vadd.f32 0.0, %v878
      %v880 = vpop.f32.mrb[0].mxu0
      %881 = vmatprep.mubr.f32.mxu0 0.0
      %882 = vmatmul.mubr.f32.gmra.mrb[0].mxu0 %v774
      %v883 = vpop.f32.mrb[0].mxu0
      %v884 = vadd.f32 0.0, %v883
      %v885 = vpop.f32.mrb[0].mxu0
      %886 = vmatprep.mubr.f32.mxu0 0.0
      %887 = vmatmul.mubr.f32.gmra.mrb[0].mxu0 %v777
      %v888 = vpop.f32.mrb[0].mxu0
      %v889 = vadd.f32 0.0, %v888
      %v890 = vpop.f32.mrb[0].mxu0
      %891 = vmatprep.mubr.f32.mxu0 0.0
      %892 = vmatmul.mubr.f32.gmra.mrb[0].mxu0 %v780
      %v893 = vpop.f32.mrb[0].mxu0
      %v894 = vadd.f32 0.0, %v893
      %v895 = vpop.f32.mrb[0].mxu0
      %896 = vmatprep.mubr.f32.mxu0 0.0
      %897 = vmatmul.mubr.f32.gmra.mrb[0].mxu0 %v783
      %v898 = vpop.f32.mrb[0].mxu0
      %v899 = vadd.f32 0.0, %v898
      %v900 = vpop.f32.mrb[0].mxu0
      %901 = vdwg.mxu0
      %v902 = vmul.f32 %v864, 0.25
      %v903 = vmul.f32 %v869, 0.25
      %v904 = vmul.f32 %v874, 0.25
      %v905 = vmul.f32 %v879, 0.25
      %v906 = vmul.f32 %v884, 0.25
      %v907 = vmul.f32 %v889, 0.25
      %v908 = vmul.f32 %v894, 0.25
      %v909 = vmul.f32 %v899, 0.25
      %v910 = vld [vmem:[%s3] sm:$0xff]
      %v911 = vld [vmem:[%s3 + $0x8] sm:$0xff]
      %v912 = vld [vmem:[%s3 + $0x10] sm:$0xff]
      %v913 = vld [vmem:[%s3 + $0x18] sm:$0xff]
      %v914 = vld [vmem:[%s3 + $0x20] sm:$0xff]
      %v915 = vld [vmem:[%s3 + $0x28] sm:$0xff]
      %v916 = vld [vmem:[%s3 + $0x30] sm:$0xff]
      %v917 = vld [vmem:[%s3 + $0x38] sm:$0xff]
      %v918 = vadd.f32 %v902, %v910
      %v919 = vadd.f32 %v903, %v911
      %v920 = vadd.f32 %v904, %v912
      %v921 = vadd.f32 %v905, %v913
      %v922 = vadd.f32 %v906, %v914
      %v923 = vadd.f32 %v907, %v915
      %v924 = vadd.f32 %v908, %v916
      %v925 = vadd.f32 %v909, %v917
      %v926 = vsel %vm319, %v918, -inf
      %927 = vmax.xlane.f32.xlu0 %v926
      %v928 = vpop.xlane.xlu0 %927
      %v929 = vsel %vm319, %v919, -inf
      %930 = vmax.xlane.f32.xlu0 %v929
      %v931 = vpop.xlane.xlu0 %930
      %v932 = vsel %vm319, %v920, -inf
      %933 = vmax.xlane.f32.xlu0 %v932
      %v934 = vpop.xlane.xlu0 %933
      %v935 = vsel %vm319, %v921, -inf
      %936 = vmax.xlane.f32.xlu0 %v935
      %v937 = vpop.xlane.xlu0 %936
      %v938 = vsel %vm319, %v922, -inf
      %939 = vmax.xlane.f32.xlu0 %v938
      %v940 = vpop.xlane.xlu0 %939
      %v941 = vsel %vm319, %v923, -inf
      %942 = vmax.xlane.f32.xlu0 %v941
      %v943 = vpop.xlane.xlu0 %942
      %v944 = vsel %vm319, %v924, -inf
      %945 = vmax.xlane.f32.xlu0 %v944
      %v946 = vpop.xlane.xlu0 %945
      %v947 = vsel %vm319, %v925, -inf
      %948 = vmax.xlane.f32.xlu0 %v947
      %v949 = vpop.xlane.xlu0 %948
      %v950 = vsub.f32 %v918, %v928
      %v951 = vsub.f32 %v919, %v931
      %v952 = vsub.f32 %v920, %v934
      %v953 = vsub.f32 %v921, %v937
      %v954 = vsub.f32 %v922, %v940
      %v955 = vsub.f32 %v923, %v943
      %v956 = vsub.f32 %v924, %v946
      %v957 = vsub.f32 %v925, %v949
      %v958 = vmul.f32 %v950, 1.442695
      %v959 = vpow.pop %v958
      %v960 = vmul.f32 %v951, 1.442695
      %v961 = vpow.pop %v960
      %v962 = vmul.f32 %v952, 1.442695
      %v963 = vpow.pop %v962
      %v964 = vmul.f32 %v953, 1.442695
      %v965 = vpow.pop %v964
      %v966 = vmul.f32 %v954, 1.442695
      %v967 = vpow.pop %v966
      %v968 = vmul.f32 %v955, 1.442695
      %v969 = vpow.pop %v968
      %v970 = vmul.f32 %v956, 1.442695
      %v971 = vpow.pop %v970
      %v972 = vmul.f32 %v957, 1.442695
      %v973 = vpow.pop %v972
      %v974 = vsel %vm319, %v959, 0.0
      %975 = vadd.xlane.f32.xlu0 %v974
      %v976 = vpop.xlane.xlu0 %975
      %v977 = vsel %vm319, %v961, 0.0
      %978 = vadd.xlane.f32.xlu0 %v977
      %v979 = vpop.xlane.xlu0 %978
      %v980 = vsel %vm319, %v963, 0.0
      %981 = vadd.xlane.f32.xlu0 %v980
      %v982 = vpop.xlane.xlu0 %981
      %v983 = vsel %vm319, %v965, 0.0
      %984 = vadd.xlane.f32.xlu0 %v983
      %v985 = vpop.xlane.xlu0 %984
      %v986 = vsel %vm319, %v967, 0.0
      %987 = vadd.xlane.f32.xlu0 %v986
      %v988 = vpop.xlane.xlu0 %987
      %v989 = vsel %vm319, %v969, 0.0
      %990 = vadd.xlane.f32.xlu0 %v989
      %v991 = vpop.xlane.xlu0 %990
      %v992 = vsel %vm319, %v971, 0.0
      %993 = vadd.xlane.f32.xlu0 %v992
      %v994 = vpop.xlane.xlu0 %993
      %v995 = vsel %vm319, %v973, 0.0
      %996 = vadd.xlane.f32.xlu0 %v995
      %v997 = vpop.xlane.xlu0 %996
      %v998 = vrcp.pop %v976
      %v999 = vrcp.pop %v979
      %v1000 = vrcp.pop %v982
      %v1001 = vrcp.pop %v985
      %v1002 = vrcp.pop %v988
      %v1003 = vrcp.pop %v991
      %v1004 = vrcp.pop %v994
      %v1005 = vrcp.pop %v997
      %v1006 = vmul.f32 %v959, %v998
      %v1007 = vmul.f32 %v961, %v999
      %v1008 = vmul.f32 %v963, %v1000
      %v1009 = vmul.f32 %v965, %v1001
      %v1010 = vmul.f32 %v967, %v1002
      %v1011 = vmul.f32 %v969, %v1003
      %v1012 = vmul.f32 %v971, %v1004
      %v1013 = vmul.f32 %v973, %v1005
      %1018 = vrot.lane.b32.xlu0 %v725, 96
      %v1019 = vpop.permute.xlu0 %1018
      %1020 = vrot.lane.b32.xlu0 %v730, 96
      %v1021 = vpop.permute.xlu0 %1020
      %1022 = vrot.lane.b32.xlu0 %v735, 96
      %v1023 = vpop.permute.xlu0 %1022
      %1024 = vrot.lane.b32.xlu0 %v740, 96
      %v1025 = vpop.permute.xlu0 %1024
      %v1031 = vsel %vm319, %v1006, 0
      %v1034 = vsel %vm319, %v1007, 0
      %v1037 = vsel %vm319, %v1008, 0
      %v1040 = vsel %vm319, %v1009, 0
      %v1043 = vsel %vm319, %v1010, 0
      %v1046 = vsel %vm319, %v1011, 0
      %v1049 = vsel %vm319, %v1012, 0
      %v1052 = vsel %vm319, %v1013, 0
      %1054 = vmatprep.subr.mxu0 0.0
      %1055 = vmatpush1.msra.mxu0 %v1019
      %1056 = vmatprep.subr.mxu0 0.0
      %1057 = vmatpush1.msra.mxu0 %v1021
      %1058 = vmatprep.subr.mxu0 0.0
      %1059 = vmatpush1.msra.mxu0 %v1023
      %1060 = vmatprep.subr.mxu0 0.0
      %1061 = vmatpush1.msra.mxu0 %v1025
      %1062 = vmatprep.subr.mxu0 0.0
      %1063 = vmatpush1.msra.mxu0 0.0
      %1064 = vmatprep.subr.mxu0 0.0
      %1065 = vmatpush1.msra.mxu0 0.0
      %1066 = vmatprep.subr.mxu0 0.0
      %1067 = vmatpush1.msra.mxu0 0.0
      %1068 = vmatprep.subr.mxu0 0.0
      %1069 = vmatpush1.msra.mxu0 0.0
      %1070 = vmatprep.subr.mxu0 0.0
      %1071 = vmatpush1.msra.mxu0 0.0
      %1072 = vmatprep.subr.mxu0 0.0
      %1073 = vmatpush1.msra.mxu0 0.0
      %1074 = vmatprep.subr.mxu0 0.0
      %1075 = vmatpush1.msra.mxu0 0.0
      %1076 = vmatprep.subr.mxu0 0.0
      %1077 = vmatpush1.msra.mxu0 0.0
      %1078 = vmatprep.subr.mxu0 0.0
      %1079 = vmatpush1.msra.mxu0 0.0
      %1080 = vmatprep.subr.mxu0 0.0
      %1081 = vmatpush1.msra.mxu0 0.0
      %1082 = vmatprep.subr.mxu0 0.0
      %1083 = vmatpush1.msra.mxu0 0.0
      %1084 = vmatprep.subr.mxu0 0.0
      %1085 = vmatpush1.msra.mxu0 0.0
      %1086 = vmatprep.subr.mxu0 0.0
      %1087 = vmatpush1.msra.mxu0 0.0
      %1088 = vmatprep.subr.mxu0 0.0
      %1089 = vmatpush1.msra.mxu0 0.0
      %1090 = vmatprep.subr.mxu0 0.0
      %1091 = vmatpush1.msra.mxu0 0.0
      %1092 = vmatprep.subr.mxu0 0.0
      %1093 = vmatpush1.msra.mxu0 0.0
      %1094 = vmatprep.subr.mxu0 0.0
      %1095 = vmatpush1.msra.mxu0 0.0
      %1096 = vmatprep.subr.mxu0 0.0
      %1097 = vmatpush1.msra.mxu0 0.0
      %1098 = vmatprep.subr.mxu0 0.0
      %1099 = vmatpush1.msra.mxu0 0.0
      %1100 = vmatprep.subr.mxu0 0.0
      %1101 = vmatpush1.msra.mxu0 0.0
      %1102 = vmatprep.subr.mxu0 0.0
      %1103 = vmatpush1.msra.mxu0 0.0
      %1104 = vmatprep.subr.mxu0 0.0
      %1105 = vmatpush1.msra.mxu0 0.0
      %1106 = vmatprep.subr.mxu0 0.0
      %1107 = vmatpush1.msra.mxu0 0.0
      %1108 = vmatprep.subr.mxu0 0.0
      %1109 = vmatpush1.msra.mxu0 0.0
      %1110 = vmatprep.subr.mxu0 0.0
      %1111 = vmatpush1.msra.mxu0 0.0
      %1112 = vmatprep.subr.mxu0 0.0
      %1113 = vmatpush1.msra.mxu0 0.0
      %1114 = vmatprep.subr.mxu0 0.0
      %1115 = vmatpush1.msra.mxu0 0.0
      %1116 = vmatprep.subr.mxu0 0.0
      %1117 = vmatpush1.msra.mxu0 0.0
      %1118 = vmatprep.mubr.f32.mxu0 0.0
      %1119 = vmatmul.mubr.f32.gmra.mrb[0].mxu0 %v1031
      %v1120 = vpop.f32.mrb[0].mxu0
      %v1121 = vadd.f32 0.0, %v1120
      %v1122 = vpop.f32.mrb[0].mxu0
      %1123 = vmatprep.mubr.f32.mxu0 0.0
      %1124 = vmatmul.mubr.f32.gmra.mrb[0].mxu0 %v1034
      %v1125 = vpop.f32.mrb[0].mxu0
      %v1126 = vadd.f32 0.0, %v1125
      %v1127 = vpop.f32.mrb[0].mxu0
      %1128 = vmatprep.mubr.f32.mxu0 0.0
      %1129 = vmatmul.mubr.f32.gmra.mrb[0].mxu0 %v1037
      %v1130 = vpop.f32.mrb[0].mxu0
      %v1131 = vadd.f32 0.0, %v1130
      %v1132 = vpop.f32.mrb[0].mxu0
      %1133 = vmatprep.mubr.f32.mxu0 0.0
      %1134 = vmatmul.mubr.f32.gmra.mrb[0].mxu0 %v1040
      %v1135 = vpop.f32.mrb[0].mxu0
      %v1136 = vadd.f32 0.0, %v1135
      %v1137 = vpop.f32.mrb[0].mxu0
      %1138 = vmatprep.mubr.f32.mxu0 0.0
      %1139 = vmatmul.mubr.f32.gmra.mrb[0].mxu0 %v1043
      %v1140 = vpop.f32.mrb[0].mxu0
      %v1141 = vadd.f32 0.0, %v1140
      %v1142 = vpop.f32.mrb[0].mxu0
      %1143 = vmatprep.mubr.f32.mxu0 0.0
      %1144 = vmatmul.mubr.f32.gmra.mrb[0].mxu0 %v1046
      %v1145 = vpop.f32.mrb[0].mxu0
      %v1146 = vadd.f32 0.0, %v1145
      %v1147 = vpop.f32.mrb[0].mxu0
      %1148 = vmatprep.mubr.f32.mxu0 0.0
      %1149 = vmatmul.mubr.f32.gmra.mrb[0].mxu0 %v1049
      %v1150 = vpop.f32.mrb[0].mxu0
      %v1151 = vadd.f32 0.0, %v1150
      %v1152 = vpop.f32.mrb[0].mxu0
      %1153 = vmatprep.mubr.f32.mxu0 0.0
      %1154 = vmatmul.mubr.f32.gmra.mrb[0].mxu0 %v1052
      %v1155 = vpop.f32.mrb[0].mxu0
      %v1156 = vadd.f32 0.0, %v1155
      %v1157 = vpop.f32.mrb[0].mxu0
      %1158 = vdwg.mxu0
      %v1159 = vmul.f32 %v1121, %v747
      %v1160 = vmul.f32 %v1126, %v747
      %v1161 = vmul.f32 %v1131, %v747
      %v1162 = vmul.f32 %v1136, %v747
      %v1163 = vmul.f32 %v1141, %v756
      %v1164 = vmul.f32 %v1146, %v756
      %v1165 = vmul.f32 %v1151, %v756
      %v1166 = vmul.f32 %v1156, %v756
      %v1167 = vadd.f32 %v1159, %v1163
      %v1168 = vadd.f32 %v1160, %v1164
      %v1169 = vadd.f32 %v1161, %v1165
      %v1170 = vadd.f32 %v1162, %v1166
      %v1171 = vld [vmem:[%s6] sm:$0xff]
      %v1172 = vld [vmem:[%s6 + $0x8] sm:$0xff]
      %v1173 = vld [vmem:[%s6 + $0x10] sm:$0xff]
      %v1174 = vld [vmem:[%s6 + $0x18] sm:$0xff]
      %v1175 = vlaneseq
      %v1176 = vshrl.u32 %v1175, 7
      %v1177 = vsub.s32 0, %v1176
      %v1178 = vrot.slane %v318, %v1177
      %v1180 = vsel %vm319, %v1167, 0
      %v1183 = vsel %vm319, %v1168, 0
      %v1186 = vsel %vm319, %v1169, 0
      %v1189 = vsel %vm319, %v1170, 0
      %1191 = vmatprep.subr.mxu0 0.0
      %1192 = vmatpush1.msra.mxu0 %v1171
      %1193 = vmatprep.subr.mxu0 0.0
      %1194 = vmatpush1.msra.mxu0 %v1172
      %1195 = vmatprep.subr.mxu0 0.0
      %1196 = vmatpush1.msra.mxu0 %v1173
      %1197 = vmatprep.subr.mxu0 0.0
      %1198 = vmatpush1.msra.mxu0 %v1174
      %1199 = vmatprep.subr.mxu0 0.0
      %1200 = vmatpush1.msra.mxu0 0.0
      %1201 = vmatprep.subr.mxu0 0.0
      %1202 = vmatpush1.msra.mxu0 0.0
      %1203 = vmatprep.subr.mxu0 0.0
      %1204 = vmatpush1.msra.mxu0 0.0
      %1205 = vmatprep.subr.mxu0 0.0
      %1206 = vmatpush1.msra.mxu0 0.0
      %1207 = vmatprep.subr.mxu0 0.0
      %1208 = vmatpush1.msra.mxu0 0.0
      %1209 = vmatprep.subr.mxu0 0.0
      %1210 = vmatpush1.msra.mxu0 0.0
      %1211 = vmatprep.subr.mxu0 0.0
      %1212 = vmatpush1.msra.mxu0 0.0
      %1213 = vmatprep.subr.mxu0 0.0
      %1214 = vmatpush1.msra.mxu0 0.0
      %1215 = vmatprep.subr.mxu0 0.0
      %1216 = vmatpush1.msra.mxu0 0.0
      %1217 = vmatprep.subr.mxu0 0.0
      %1218 = vmatpush1.msra.mxu0 0.0
      %1219 = vmatprep.subr.mxu0 0.0
      %1220 = vmatpush1.msra.mxu0 0.0
      %1221 = vmatprep.subr.mxu0 0.0
      %1222 = vmatpush1.msra.mxu0 0.0
      %1223 = vmatprep.subr.mxu0 0.0
      %1224 = vmatpush1.msra.mxu0 0.0
      %1225 = vmatprep.subr.mxu0 0.0
      %1226 = vmatpush1.msra.mxu0 0.0
      %1227 = vmatprep.subr.mxu0 0.0
      %1228 = vmatpush1.msra.mxu0 0.0
      %1229 = vmatprep.subr.mxu0 0.0
      %1230 = vmatpush1.msra.mxu0 0.0
      %1231 = vmatprep.subr.mxu0 0.0
      %1232 = vmatpush1.msra.mxu0 0.0
      %1233 = vmatprep.subr.mxu0 0.0
      %1234 = vmatpush1.msra.mxu0 0.0
      %1235 = vmatprep.subr.mxu0 0.0
      %1236 = vmatpush1.msra.mxu0 0.0
      %1237 = vmatprep.subr.mxu0 0.0
      %1238 = vmatpush1.msra.mxu0 0.0
      %1239 = vmatprep.subr.mxu0 0.0
      %1240 = vmatpush1.msra.mxu0 0.0
      %1241 = vmatprep.subr.mxu0 0.0
      %1242 = vmatpush1.msra.mxu0 0.0
      %1243 = vmatprep.subr.mxu0 0.0
      %1244 = vmatpush1.msra.mxu0 0.0
      %1245 = vmatprep.subr.mxu0 0.0
      %1246 = vmatpush1.msra.mxu0 0.0
      %1247 = vmatprep.subr.mxu0 0.0
      %1248 = vmatpush1.msra.mxu0 0.0
      %1249 = vmatprep.subr.mxu0 0.0
      %1250 = vmatpush1.msra.mxu0 0.0
      %1251 = vmatprep.subr.mxu0 0.0
      %1252 = vmatpush1.msra.mxu0 0.0
      %1253 = vmatprep.subr.mxu0 0.0
      %1254 = vmatpush1.msra.mxu0 0.0
      %1255 = vmatprep.mubr.f32.mxu0 0.0
      %1256 = vmatmul.mubr.f32.gmra.mrb[0].mxu0 %v1180
      %v1257 = vpop.f32.mrb[0].mxu0
      %v1258 = vadd.f32 %v1178, %v1257
      %v1259 = vpop.f32.mrb[0].mxu0
      %1260 = vmatprep.mubr.f32.mxu0 0.0
      %1261 = vmatmul.mubr.f32.gmra.mrb[0].mxu0 %v1183
      %v1262 = vpop.f32.mrb[0].mxu0
      %v1263 = vadd.f32 %v1178, %v1262
      %v1264 = vpop.f32.mrb[0].mxu0
      %1265 = vmatprep.mubr.f32.mxu0 0.0
      %1266 = vmatmul.mubr.f32.gmra.mrb[0].mxu0 %v1186
      %v1267 = vpop.f32.mrb[0].mxu0
      %v1268 = vadd.f32 %v1178, %v1267
      %v1269 = vpop.f32.mrb[0].mxu0
      %1270 = vmatprep.mubr.f32.mxu0 0.0
      %1271 = vmatmul.mubr.f32.gmra.mrb[0].mxu0 %v1189
      %v1272 = vpop.f32.mrb[0].mxu0
      %v1273 = vadd.f32 %v1178, %v1272
      %v1274 = vpop.f32.mrb[0].mxu0
      %1275 = vdwg.mxu0
      %v1276 = vadd.f32 %v1258, %v304
      %v1277 = vadd.f32 %v1263, %v305
      %v1278 = vadd.f32 %v1268, %v306
      %v1279 = vadd.f32 %v1273, %v307
      %1280 = vst.msk [vmem:[%s302] sm:$0xff] %vm319, %v1276
      %1281 = vst.msk [vmem:[%s302 + $0x8] sm:$0xff] %vm319, %v1277
      %1282 = vst.msk [vmem:[%s302 + $0x10] sm:$0xff] %vm319, %v1278
      %1283 = vst.msk [vmem:[%s302 + $0x18] sm:$0xff] %vm319, %v1279
      %s1284 = smul.u32 4, %s18
      %p1285 = scmp.lt.s32.totalorder %s1284, 7
      %s1286 = scalar_select %p1285, %s1284, 7
      %s1287 = smul.addr %s1286, 8
      %s1288 = scalar_lea.vmem %s7, %s1287
      // Predicated region
      $region49: #{tpu_custom_call.1} parent=47 // pred_check
        %p1289 = pneg %p193
      $region50: #{tpu_custom_call.1} parent=47 // pred_check_branch
        %1291 = sbr.rel (%p1289) target = $region52
      $region51: #{tpu_custom_call.1} parent=47 // pred_region
        %s1292 = smul.u32 4, %s18
      $region52: #{tpu_custom_call.1} parent=47 // pred_fallthru
        _
    $region48: #{tpu_custom_call.1} parent=5 // pred_fallthru
      _
    %p1293 = scmp.le.s32.totalorder 2, %s13
    // Predicated region
    $region53: #{tpu_custom_call.1} parent=5 // pred_check
      %p1294 = pneg %p1293
    $region54: #{tpu_custom_call.1} parent=5 // pred_check_branch
      %1296 = sbr.rel (%p1294) target = $region56
    $region55: #{tpu_custom_call.1} parent=5 // pred_region
      %s1297 = ssub.s32 %s13, 2
      // Predicated region
      $region57: #{tpu_custom_call.1} parent=55 // pred_check
        %p1298 = pneg %p199
      $region58: #{tpu_custom_call.1} parent=55 // pred_check_branch
        %1300 = sbr.rel (%p1298) target = $region60
      $region59: #{tpu_custom_call.1} parent=55 // pred_region
        %s1301 = smul.u32 4, %s19
        %p1302 = scmp.lt.s32.totalorder %s1301, 7
        %s1303 = scalar_select %p1302, %s1301, 7
        %s1304 = smul.addr %s1303, 8
        %s1305 = scalar_lea.vmem %s7, %s1304
      $region60: #{tpu_custom_call.1} parent=55 // pred_fallthru
        _
    $region56: #{tpu_custom_call.1} parent=5 // pred_fallthru
      _
  $region6: #{tpu_custom_call.1} parent=0 // loop_footer
    %s17 = sadd.s32 1, %s13
  $region7: #{tpu_custom_call.1} parent=0 // loop_footer_branch
    %12 = sbr.rel target = $region3
  $region8: #{tpu_custom_call.1} parent=0 // loop_exit
    _

</llo_original>
